<compile_context>
chip_gen: v5e
topology: v5e:2x2
jax: 0.10.0
libtpu: 0.0.40
codegen_flags: <defaults>
</compile_context>

<pallas_src>
import functools

import jax
import jax.numpy as jnp
import numpy as np
from jax.experimental import pallas as pl
from jax.experimental.pallas import tpu as pltpu

VMEM_LIMIT = 64 * 1024 * 1024


def _round_up(x, m):
    return ((x + m - 1) // m) * m


def _pick_row_tile(M, max_tile=512):
    if M <= max_tile:
        return M
    for cand in (512, 256, 128, 64, 32, 16, 8):
        if M % cand == 0:
            return cand
    return M


def _pick_col_tile(De, max_tile=1024):
    if De <= max_tile:
        return De
    t = 512
    while t >= 128:
        if De % t == 0:
            return t
        t -= 128
    return De


def _pick_vocab_tile(Vp, max_tile=2048):
    """Vp is a multiple of 128; return the largest 128-multiple divisor <= max_tile."""
    if Vp <= max_tile:
        return Vp
    t = max_tile - (max_tile % 128)
    while t >= 128:
        if Vp % t == 0:
            return t
        t -= 128
    return 128


# ----------------------------------------------------------------------------
# Encoder stand-in kernel: bf16 patch features @ bf16 W (f32 acc) + f32 bias
# ----------------------------------------------------------------------------
def _encoder_proj_kernel(x_ref, w_ref, b_ref, o_ref):
    o_ref[...] = (
        jnp.dot(x_ref[...], w_ref[...], preferred_element_type=jnp.float32)
        + b_ref[...]
    )


def encoder_forward(images, w_enc, b_enc, patch=4):
    """images: [B, C, H, W] (NCHW) -> features: [B, (H/p)*(W/p), encoder_dim] (f32)."""
    B, C, H, W = images.shape
    p = patch
    # glue: extract non-overlapping p x p patches (matches a stride-p conv im2col)
    x = images.reshape(B, C, H // p, p, W // p, p)
    x = x.transpose(0, 2, 4, 1, 3, 5).reshape(B * (H // p) * (W // p), C * p * p)
    M, K = x.shape
    De = w_enc.shape[1]

    tm = _pick_row_tile(M)
    tn = _pick_col_tile(De)

    x_bf = x.astype(jnp.bfloat16)
    w_bf = w_enc.astype(jnp.bfloat16)

    out = pl.pallas_call(
        _encoder_proj_kernel,
        out_shape=jax.ShapeDtypeStruct((M, De), jnp.float32),
        grid_spec=pltpu.PrefetchScalarGridSpec(
            num_scalar_prefetch=0,
            grid=(M // tm, De // tn),
            in_specs=[
                pl.BlockSpec((tm, K), lambda i, j: (i, 0)),
                pl.BlockSpec((K, tn), lambda i, j: (0, j)),
                pl.BlockSpec((1, tn), lambda i, j: (0, j)),
            ],
            out_specs=pl.BlockSpec((tm, tn), lambda i, j: (i, j)),
        ),
        compiler_params=pltpu.CompilerParams(
            dimension_semantics=("parallel", "parallel"),
            vmem_limit_bytes=VMEM_LIMIT,
        ),
    )(x_bf, w_bf, b_enc)
    return out.reshape(B, (H // p) * (W // p), De)


# ----------------------------------------------------------------------------
# Recurrence kernel: attention + LSTMCell, grid = (T-1,), state in VMEM scratch.
# Outputs: per-step hidden state h_t (history) and attention alpha_t.
# ----------------------------------------------------------------------------
def _recurrence_kernel(
    features_ref,   # [B, N, De]  bf16 (resident)
    u_ref,          # [B, N, Da]  f32  (U(features)+U_b, precomputed, resident)
    embeds_ref,     # [1, B, E]   f32  (streamed per time step)
    Ww_ref, Wb_ref,             # [Dd, Da], [1, Da]  f32
    Aw_ref, Ab_ref,             # [1, Da],  [1, 1]   f32 (A weight as row vector)
    h0c0_ref,                   # [B, 2*Dd] f32 (precomputed init_h | init_c)
    Wih_e_ref,                  # [E,  4*Dd] bf16 (embedding part of lstm W_ih)
    Wih_c_ref,                  # [De, 4*Dd] bf16 (context part of lstm W_ih)
    Whh_ref,                    # [Dd, 4*Dd] f32  (kept f32: h rounding would compound)
    b_gates_ref,                # [1, 4*Dd]  f32  (b_ih + b_hh)
    h_out_ref,      # out: [1, B, Dd] f32
    alphas_ref,     # out: [1, B, N]  f32
    h_scr,          # scratch: [B, Dd] f32 (persists across grid steps)
    c_scr,          # scratch: [B, Dd] f32
):
    t = pl.program_id(0)
    Dd = h_scr.shape[1]

    @pl.when(t == 0)
    def _init():
        h_scr[...] = h0c0_ref[:, :Dd]
        c_scr[...] = h0c0_ref[:, Dd:]

    features = features_ref[...]
    h = h_scr[...]
    c = c_scr[...]

    # Bahdanau attention (scores via VPU multiply + lane reduction, avoiding a
    # degenerate output-width-1 MXU matmul); exact softmax normalization.
    w_ah = jnp.dot(h, Ww_ref[...], preferred_element_type=jnp.float32) + Wb_ref[...]
    combined = jnp.tanh(u_ref[...] + w_ah[:, None, :])                    # [B, N, Da]
    scores = jnp.sum(combined * Aw_ref[...], axis=-1) + Ab_ref[...]       # [B, N]
    scores = scores - jnp.max(scores, axis=1, keepdims=True)
    e = jnp.exp(scores)
    alpha = e / jnp.sum(e, axis=1, keepdims=True)
    context = jnp.sum(features * alpha[:, :, None], axis=1)               # [B, De] f32

    # LSTMCell (gate order i, f, g, o as in PyTorch). W_ih matmuls in bf16 with f32
    # accumulation; W_hh @ h stays f32 so recurrent rounding does not accumulate.
    emb = embeds_ref[0]                                                   # [B, E]
    gates = (
        jnp.dot(emb.astype(jnp.bfloat16), Wih_e_ref[...],
                preferred_element_type=jnp.float32)
        + jnp.dot(context.astype(jnp.bfloat16), Wih_c_ref[...],
                  preferred_element_type=jnp.float32)
        + jnp.dot(h, Whh_ref[...], preferred_element_type=jnp.float32)
        + b_gates_ref[...]
    )                                                                     # [B, 4*Dd]
    i_g = jax.nn.sigmoid(gates[:, 0 * Dd:1 * Dd])
    f_g = jax.nn.sigmoid(gates[:, 1 * Dd:2 * Dd])
    g_g = jnp.tanh(gates[:, 2 * Dd:3 * Dd])
    o_g = jax.nn.sigmoid(gates[:, 3 * Dd:4 * Dd])
    c_new = f_g * c + i_g * g_g
    h_new = o_g * jnp.tanh(c_new)

    h_scr[...] = h_new
    c_scr[...] = c_new
    h_out_ref[0] = h_new
    alphas_ref[0] = alpha


# ----------------------------------------------------------------------------
# Vocab projection kernel: batched over time, fcn_w read from HBM exactly once.
# ----------------------------------------------------------------------------
def _vocab_proj_kernel(h_ref, w_ref, b_ref, o_ref):
    o_ref[...] = (
        jnp.dot(h_ref[...], w_ref[...], preferred_element_type=jnp.float32)
        + b_ref[...]
    )


def decoder_forward(features, captions, params):
    """features: [B, N, De] f32, captions: [B, T] int32 -> (preds [B,T-1,V], alphas [B,T-1,N])."""
    B, N, De = features.shape
    T = captions.shape[1]
    Tm1 = T - 1
    E = params["embedding"].shape[1]
    Da = params["U_w"].shape[1]
    Dd = params["init_h_w"].shape[1]
    V = params["fcn_w"].shape[1]

    # --- one-shot / step-invariant precompute in plain JAX (outside the hot loop) ---
    embeds = params["embedding"][captions[:, :Tm1]]            # [B, Tm1, E]
    embeds_tm = jnp.transpose(embeds, (1, 0, 2))               # [Tm1, B, E]
    u = features @ params["U_w"] + params["U_b"]               # [B, N, Da]
    mean_feat = features.mean(axis=1)                          # [B, De]
    h0 = mean_feat @ params["init_h_w"] + params["init_h_b"]
    c0 = mean_feat @ params["init_c_w"] + params["init_c_b"]
    h0c0 = jnp.concatenate([h0, c0], axis=1)                   # [B, 2*Dd]

    # one-time weight preprocessing
    w_ih_e = params["lstm_w_ih"][:E].astype(jnp.bfloat16)      # [E, 4*Dd]
    w_ih_c = params["lstm_w_ih"][E:].astype(jnp.bfloat16)      # [De, 4*Dd]
    w_hh = params["lstm_w_hh"]                                 # [Dd, 4*Dd] f32
    b_gates = params["lstm_b_ih"] + params["lstm_b_hh"]        # [1, 4*Dd]
    a_row = params["A_w"].T                                    # [1, Da]
    features_bf = features.astype(jnp.bfloat16)                # halves resident VMEM

    # ---------------- recurrence: grid over time, state in VMEM scratch -------------
    h_all, alphas_tm = pl.pallas_call(
        _recurrence_kernel,
        out_shape=(
            jax.ShapeDtypeStruct((Tm1, B, Dd), jnp.float32),
            jax.ShapeDtypeStruct((Tm1, B, N), jnp.float32),
        ),
        grid_spec=pltpu.PrefetchScalarGridSpec(
            num_scalar_prefetch=0,
            grid=(Tm1,),
            in_specs=[
                pl.BlockSpec((B, N, De), lambda t: (0, 0, 0)),      # features (bf16, resident)
                pl.BlockSpec((B, N, Da), lambda t: (0, 0, 0)),      # U(features)+U_b (resident)
                pl.BlockSpec((1, B, E), lambda t: (t, 0, 0)),       # embeds for step t
                pl.BlockSpec((Dd, Da), lambda t: (0, 0)),           # W_w
                pl.BlockSpec((1, Da), lambda t: (0, 0)),            # W_b
                pl.BlockSpec((1, Da), lambda t: (0, 0)),            # A row
                pl.BlockSpec((1, 1), lambda t: (0, 0)),             # A_b
                pl.BlockSpec((B, 2 * Dd), lambda t: (0, 0)),        # h0 | c0
                pl.BlockSpec((E, 4 * Dd), lambda t: (0, 0)),        # W_ih (embed part, bf16)
                pl.BlockSpec((De, 4 * Dd), lambda t: (0, 0)),       # W_ih (context part, bf16)
                pl.BlockSpec((Dd, 4 * Dd), lambda t: (0, 0)),       # W_hh (f32)
                pl.BlockSpec((1, 4 * Dd), lambda t: (0, 0)),        # combined gate bias
            ],
            out_specs=(
                pl.BlockSpec((1, B, Dd), lambda t: (t, 0, 0)),      # h_t history
                pl.BlockSpec((1, B, N), lambda t: (t, 0, 0)),       # alpha_t
            ),
            scratch_shapes=[
                pltpu.VMEM((B, Dd), jnp.float32),                   # h
                pltpu.VMEM((B, Dd), jnp.float32),                   # c
            ],
        ),
        compiler_params=pltpu.CompilerParams(
            dimension_semantics=("arbitrary",),
            vmem_limit_bytes=VMEM_LIMIT,
        ),
    )(features_bf, u, embeds_tm, params["W_w"], params["W_b"], a_row,
      params["A_b"], h0c0, w_ih_e, w_ih_c, w_hh, b_gates)

    # ---------------- vocab projection: batched over time, tiled, parallel ----------
    # TODO(synk): nn.Dropout implemented as identity (eval-mode semantics).
    Vp = _round_up(V, 128)                                     # lane-dense output
    fcn_w = params["fcn_w"].astype(jnp.bfloat16)
    fcn_b = params["fcn_b"]
    if Vp != V:
        fcn_w = jnp.pad(fcn_w, ((0, 0), (0, Vp - V)))
        fcn_b = jnp.pad(fcn_b, ((0, 0), (0, Vp - V)))
    tV = _pick_vocab_tile(Vp)

    M = Tm1 * B
    h_flat = h_all.reshape(M, Dd).astype(jnp.bfloat16)
    Mp = _round_up(M, 8)
    if Mp <= 256:
        tM = Mp
    else:
        tM = 256
        Mp = _round_up(Mp, 256)
    if Mp != M:
        h_flat = jnp.pad(h_flat, ((0, Mp - M), (0, 0)))

    preds_flat = pl.pallas_call(
        _vocab_proj_kernel,
        out_shape=jax.ShapeDtypeStruct((Mp, Vp), jnp.float32),
        grid_spec=pltpu.PrefetchScalarGridSpec(
            num_scalar_prefetch=0,
            grid=(Mp // tM, Vp // tV),
            in_specs=[
                pl.BlockSpec((tM, Dd), lambda i, j: (i, 0)),        # h history rows
                pl.BlockSpec((Dd, tV), lambda i, j: (0, j)),        # fcn_w tile (read once)
                pl.BlockSpec((1, tV), lambda i, j: (0, j)),         # fcn_b tile
            ],
            out_specs=pl.BlockSpec((tM, tV), lambda i, j: (i, j)),
        ),
        compiler_params=pltpu.CompilerParams(
            dimension_semantics=("parallel", "parallel"),
            vmem_limit_bytes=VMEM_LIMIT,
        ),
    )(h_flat, fcn_w, fcn_b)

    preds = preds_flat[:M, :V].reshape(Tm1, B, V).transpose(1, 0, 2)   # [B, T-1, V]
    alphas = jnp.transpose(alphas_tm, (1, 0, 2))                       # [B, T-1, N]
    return preds, alphas


# ----------------------------------------------------------------------------
# Full EncoderDecoder forward
# ----------------------------------------------------------------------------
@functools.partial(jax.jit, static_argnames=("patch",))
def encoder_decoder_forward(images, captions, params, patch=4):
    features = encoder_forward(images, params["enc_w"], params["enc_b"], patch=patch)
    return decoder_forward(features, captions, params)


# ----------------------------------------------------------------------------
# Pure-JAX f32 reference (for correctness check)
# ----------------------------------------------------------------------------
def reference_forward(images, captions, params, patch=4):
    B, C, H, W = images.shape
    p = patch
    x = images.reshape(B, C, H // p, p, W // p, p)
    x = x.transpose(0, 2, 4, 1, 3, 5).reshape(B, (H // p) * (W // p), C * p * p)
    features = x @ params["enc_w"] + params["enc_b"]

    embeds = params["embedding"][captions]
    mean_feat = features.mean(axis=1)
    h = mean_feat @ params["init_h_w"] + params["init_h_b"][0]
    c = mean_feat @ params["init_c_w"] + params["init_c_b"][0]
    Dd = h.shape[1]
    T = captions.shape[1]
    preds, alphas = [], []
    u_hs = features @ params["U_w"] + params["U_b"][0]
    for s in range(T - 1):
        w_ah = h @ params["W_w"] + params["W_b"][0]
        combined = jnp.tanh(u_hs + w_ah[:, None, :])
        scores = (combined @ params["A_w"] + params["A_b"][0])[..., 0]
        alpha = jax.nn.softmax(scores, axis=1)
        context = (features * alpha[:, :, None]).sum(axis=1)
        xin = jnp.concatenate([embeds[:, s], context], axis=1)
        gates = xin @ params["lstm_w_ih"] + params["lstm_b_ih"][0] \
            + h @ params["lstm_w_hh"] + params["lstm_b_hh"][0]
        i_g = jax.nn.sigmoid(gates[:, 0 * Dd:1 * Dd])
        f_g = jax.nn.sigmoid(gates[:, 1 * Dd:2 * Dd])
        g_g = jnp.tanh(gates[:, 2 * Dd:3 * Dd])
        o_g = jax.nn.sigmoid(gates[:, 3 * Dd:4 * Dd])
        c = f_g * c + i_g * g_g
        h = o_g * jnp.tanh(c)
        preds.append(h @ params["fcn_w"] + params["fcn_b"][0])
        alphas.append(alpha)
    return jnp.stack(preds, axis=1), jnp.stack(alphas, axis=1)


# ----------------------------------------------------------------------------
# Deterministic parameter construction
# ----------------------------------------------------------------------------
def make_params(key, *, img_channels, patch, embed_size, vocab_size,
                attention_dim, encoder_dim, decoder_dim):
    keys = jax.random.split(key, 20)

    def lin(k, fan_in, fan_out):
        scale = 1.0 / np.sqrt(fan_in)
        return jax.random.uniform(k, (fan_in, fan_out), jnp.float32, -scale, scale)

    def bias(k, fan_in, fan_out):
        scale = 1.0 / np.sqrt(fan_in)
        return jax.random.uniform(k, (1, fan_out), jnp.float32, -scale, scale)

    Kp = img_channels * patch * patch
    return {
        "enc_w": lin(keys[0], Kp, encoder_dim),
        "enc_b": bias(keys[1], Kp, encoder_dim),
        "embedding": jax.random.normal(keys[2], (vocab_size, embed_size), jnp.float32) * 0.1,
        "U_w": lin(keys[3], encoder_dim, attention_dim),
        "U_b": bias(keys[4], encoder_dim, attention_dim),
        "W_w": lin(keys[5], decoder_dim, attention_dim),
        "W_b": bias(keys[6], decoder_dim, attention_dim),
        "A_w": lin(keys[7], attention_dim, 1),
        "A_b": bias(keys[8], attention_dim, 1),
        "init_h_w": lin(keys[9], encoder_dim, decoder_dim),
        "init_h_b": bias(keys[10], encoder_dim, decoder_dim),
        "init_c_w": lin(keys[11], encoder_dim, decoder_dim),
        "init_c_b": bias(keys[12], encoder_dim, decoder_dim),
        "lstm_w_ih": lin(keys[13], embed_size + encoder_dim, 4 * decoder_dim),
        "lstm_b_ih": bias(keys[14], decoder_dim, 4 * decoder_dim),
        "lstm_w_hh": lin(keys[15], decoder_dim, 4 * decoder_dim),
        "lstm_b_hh": bias(keys[16], decoder_dim, 4 * decoder_dim),
        "fcn_w": lin(keys[17], decoder_dim, vocab_size),
        "fcn_b": bias(keys[18], decoder_dim, vocab_size),
    }


if __name__ == "__main__":
    # Small, forward-consistent shapes.
    B, C, H, W = 2, 4, 16, 16          # images: NCHW
    patch = 4                          # -> N = (16/4)*(16/4) = 16 feature locations
    T = 8                              # caption length -> seq_length = 7
    embed_size, vocab_size = 32, 128
    attention_dim, encoder_dim, decoder_dim = 32, 32, 32

    root = jax.random.PRNGKey(0)
    k_img, k_cap, k_par = jax.random.split(root, 3)
    images = jax.random.normal(k_img, (B, C, H, W), jnp.float32)
    captions = jax.random.randint(k_cap, (B, T), 0, vocab_size, jnp.int32)
    params = make_params(
        k_par, img_channels=C, patch=patch, embed_size=embed_size,
        vocab_size=vocab_size, attention_dim=attention_dim,
        encoder_dim=encoder_dim, decoder_dim=decoder_dim)

    preds, alphas = encoder_decoder_forward(images, captions, params, patch=patch)
    jax.block_until_ready((preds, alphas))

    # Tolerances account for bf16 MXU operands (f32 accumulation) in the kernels
    # vs. the pure-f32 reference.
    preds_ref, alphas_ref = reference_forward(images, captions, params, patch=patch)
    np.testing.assert_allclose(np.asarray(preds), np.asarray(preds_ref), rtol=3e-2, atol=3e-2)
    np.testing.assert_allclose(np.asarray(alphas), np.asarray(alphas_ref), rtol=3e-2, atol=3e-2)

    assert preds.shape == (B, T - 1, vocab_size)
    assert alphas.shape == (B, T - 1, (H // patch) * (W // patch))
    print("KERNEL_OK")
</pallas_src>

<mosaic_0001>
module attributes {stable_mosaic.version = 11 : i64} {
  func.func @_encoder_proj_kernel(%arg0: i32, %arg1: i32, %arg2: memref<32x64xbf16, #tpu.memory_space<vmem>>, %arg3: memref<64x32xbf16, #tpu.memory_space<vmem>>, %arg4: memref<1x32xf32, #tpu.memory_space<vmem>>, %arg5: memref<32x32xf32, #tpu.memory_space<vmem>>) attributes {dimension_semantics = [#tpu.dimension_semantics<parallel>, #tpu.dimension_semantics<parallel>], iteration_bounds = array<i64: 1, 1>, scalar_prefetch = 0 : i64, scratch_operands = 0 : i64, tpu.core_type = #tpu.core_type<tc>, window_params = [{transform_indices = @transform_0, window_bounds = array<i64: 32, 64>}, {transform_indices = @transform_1, window_bounds = array<i64: 64, 32>}, {transform_indices = @transform_2, window_bounds = array<i64: 1, 32>}, {transform_indices = @transform_3, window_bounds = array<i64: 32, 32>}]} {
    %c0 = arith.constant 0 : index
    %c0_0 = arith.constant 0 : index
    %0 = vector.load %arg2[%c0, %c0_0] : memref<32x64xbf16, #tpu.memory_space<vmem>>, vector<32x64xbf16>
    %c0_1 = arith.constant 0 : index
    %c0_2 = arith.constant 0 : index
    %1 = vector.load %arg3[%c0_1, %c0_2] : memref<64x32xbf16, #tpu.memory_space<vmem>>, vector<64x32xbf16>
    %cst = arith.constant dense<0.000000e+00> : vector<32x32xf32>
    %2 = tpu.matmul %0, %1, %cst {dimension_numbers = #tpu.dot_dimension_numbers<[1], [0], [0], [1], [0, 0, 1, 1], [], []>} : vector<32x64xbf16>, vector<64x32xbf16>, vector<32x32xf32> -> vector<32x32xf32>
    %c0_3 = arith.constant 0 : index
    %c0_4 = arith.constant 0 : index
    %3 = vector.load %arg4[%c0_3, %c0_4] : memref<1x32xf32, #tpu.memory_space<vmem>>, vector<1x32xf32>
    %4 = vector.broadcast %3 : vector<1x32xf32> to vector<32x32xf32>
    %5 = arith.addf %2, %4 : vector<32x32xf32>
    %c0_5 = arith.constant 0 : index
    %c0_6 = arith.constant 0 : index
    %6 = vector.load %arg5[%c0_5, %c0_6] : memref<32x32xf32, #tpu.memory_space<vmem>>, vector<32x32xf32>
    tpu.vector_store %arg5[%c0_5, %c0_6], %5 {strides = array<i32>} : memref<32x32xf32, #tpu.memory_space<vmem>>, vector<32x32xf32>,
    return
  }
  func.func @transform_0(%arg0: i32, %arg1: i32) -> (i32, i32) {
    %c0_i32 = arith.constant 0 : i32
    %c0_i32_0 = arith.constant 0 : i32
    return %arg0, %c0_i32 : i32, i32
  }
  func.func @transform_1(%arg0: i32, %arg1: i32) -> (i32, i32) {
    %c0_i32 = arith.constant 0 : i32
    %c0_i32_0 = arith.constant 0 : i32
    return %c0_i32, %arg1 : i32, i32
  }
  func.func @transform_2(%arg0: i32, %arg1: i32) -> (i32, i32) {
    %c0_i32 = arith.constant 0 : i32
    %c0_i32_0 = arith.constant 0 : i32
    return %c0_i32, %arg1 : i32, i32
  }
  func.func @transform_3(%arg0: i32, %arg1: i32) -> (i32, i32) {
    %c0_i32 = arith.constant 0 : i32
    return %arg0, %arg1 : i32, i32
  }
}

module attributes {stable_mosaic.version = 11 : i64} {
  func.func @_recurrence_kernel(%arg0: i32, %arg1: memref<2x16x32xbf16, #tpu.memory_space<vmem>>, %arg2: memref<2x16x32xf32, #tpu.memory_space<vmem>>, %arg3: memref<1x2x32xf32, #tpu.memory_space<vmem>>, %arg4: memref<32x32xf32, #tpu.memory_space<vmem>>, %arg5: memref<1x32xf32, #tpu.memory_space<vmem>>, %arg6: memref<1x32xf32, #tpu.memory_space<vmem>>, %arg7: memref<1x1xf32, #tpu.memory_space<vmem>>, %arg8: memref<2x64xf32, #tpu.memory_space<vmem>>, %arg9: memref<32x128xbf16, #tpu.memory_space<vmem>>, %arg10: memref<32x128xbf16, #tpu.memory_space<vmem>>, %arg11: memref<32x128xf32, #tpu.memory_space<vmem>>, %arg12: memref<1x128xf32, #tpu.memory_space<vmem>>, %arg13: memref<1x2x32xf32, #tpu.memory_space<vmem>>, %arg14: memref<1x2x16xf32, #tpu.memory_space<vmem>>, %arg15: memref<2x32xf32, #tpu.memory_space<vmem>>, %arg16: memref<2x32xf32, #tpu.memory_space<vmem>>) attributes {dimension_semantics = [#tpu.dimension_semantics<arbitrary>], iteration_bounds = array<i64: 7>, scalar_prefetch = 0 : i64, scratch_operands = 2 : i64, tpu.core_type = #tpu.core_type<tc>, window_params = [{pipeline_mode = #tpu.pipeline_mode<synchronous>, transform_indices = @transform_0, window_bounds = array<i64: 2, 16, 32>}, {pipeline_mode = #tpu.pipeline_mode<synchronous>, transform_indices = @transform_1, window_bounds = array<i64: 2, 16, 32>}, {transform_indices = @transform_2, window_bounds = array<i64: 1, 2, 32>}, {pipeline_mode = #tpu.pipeline_mode<synchronous>, transform_indices = @transform_3, window_bounds = array<i64: 32, 32>}, {pipeline_mode = #tpu.pipeline_mode<synchronous>, transform_indices = @transform_4, window_bounds = array<i64: 1, 32>}, {pipeline_mode = #tpu.pipeline_mode<synchronous>, transform_indices = @transform_5, window_bounds = array<i64: 1, 32>}, {pipeline_mode = #tpu.pipeline_mode<synchronous>, transform_indices = @transform_6, window_bounds = array<i64: 1, 1>}, {pipeline_mode = #tpu.pipeline_mode<synchronous>, transform_indices = @transform_7, window_bounds = array<i64: 2, 64>}, {pipeline_mode = #tpu.pipeline_mode<synchronous>, transform_indices = @transform_8, window_bounds = array<i64: 32, 128>}, {pipeline_mode = #tpu.pipeline_mode<synchronous>, transform_indices = @transform_9, window_bounds = array<i64: 32, 128>}, {pipeline_mode = #tpu.pipeline_mode<synchronous>, transform_indices = @transform_10, window_bounds = array<i64: 32, 128>}, {pipeline_mode = #tpu.pipeline_mode<synchronous>, transform_indices = @transform_11, window_bounds = array<i64: 1, 128>}, {transform_indices = @transform_12, window_bounds = array<i64: 1, 2, 32>}, {transform_indices = @transform_13, window_bounds = array<i64: 1, 2, 16>}]} {
    %c0_i32 = arith.constant 0 : i32
    %0 = arith.cmpi eq, %arg0, %c0_i32 : i32
    %1 = arith.extui %0 : i1 to i32
    %c0_i32_0 = arith.constant 0 : i32
    %2 = arith.cmpi ne, %1, %c0_i32_0 : i32
    scf.if %2 {
      %c0_49 = arith.constant 0 : index
      %c0_50 = arith.constant 0 : index
      %86 = vector.load %arg8[%c0_49, %c0_50] : memref<2x64xf32, #tpu.memory_space<vmem>>, vector<2x32xf32>
      %c0_51 = arith.constant 0 : index
      %c0_52 = arith.constant 0 : index
      %87 = vector.load %arg15[%c0_51, %c0_52] : memref<2x32xf32, #tpu.memory_space<vmem>>, vector<2x32xf32>
      tpu.vector_store %arg15[%c0_51, %c0_52], %86 {strides = array<i32>} : memref<2x32xf32, #tpu.memory_space<vmem>>, vector<2x32xf32>,
      %c0_53 = arith.constant 0 : index
      %c32 = arith.constant 32 : index
      %88 = vector.load %arg8[%c0_53, %c32] : memref<2x64xf32, #tpu.memory_space<vmem>>, vector<2x32xf32>
      %c0_54 = arith.constant 0 : index
      %c0_55 = arith.constant 0 : index
      %89 = vector.load %arg16[%c0_54, %c0_55] : memref<2x32xf32, #tpu.memory_space<vmem>>, vector<2x32xf32>
      tpu.vector_store %arg16[%c0_54, %c0_55], %88 {strides = array<i32>} : memref<2x32xf32, #tpu.memory_space<vmem>>, vector<2x32xf32>,
    } else {
    }
    %c0 = arith.constant 0 : index
    %c0_1 = arith.constant 0 : index
    %c0_2 = arith.constant 0 : index
    %3 = vector.load %arg1[%c0, %c0_1, %c0_2] : memref<2x16x32xbf16, #tpu.memory_space<vmem>>, vector<2x16x32xbf16>
    %c0_3 = arith.constant 0 : index
    %c0_4 = arith.constant 0 : index
    %4 = vector.load %arg15[%c0_3, %c0_4] : memref<2x32xf32, #tpu.memory_space<vmem>>, vector<2x32xf32>
    %c0_5 = arith.constant 0 : index
    %c0_6 = arith.constant 0 : index
    %5 = vector.load %arg16[%c0_5, %c0_6] : memref<2x32xf32, #tpu.memory_space<vmem>>, vector<2x32xf32>
    %c0_7 = arith.constant 0 : index
    %c0_8 = arith.constant 0 : index
    %6 = vector.load %arg4[%c0_7, %c0_8] : memref<32x32xf32, #tpu.memory_space<vmem>>, vector<32x32xf32>
    %cst = arith.constant dense<0.000000e+00> : vector<2x32xf32>
    %7 = tpu.matmul %4, %6, %cst {dimension_numbers = #tpu.dot_dimension_numbers<[1], [0], [0], [1], [0, 0, 1, 1], [], []>} : vector<2x32xf32>, vector<32x32xf32>, vector<2x32xf32> -> vector<2x32xf32>
    %c0_9 = arith.constant 0 : index
    %c0_10 = arith.constant 0 : index
    %8 = vector.load %arg5[%c0_9, %c0_10] : memref<1x32xf32, #tpu.memory_space<vmem>>, vector<1x32xf32>
    %9 = vector.broadcast %8 : vector<1x32xf32> to vector<2x32xf32>
    %10 = arith.addf %7, %9 : vector<2x32xf32>
    %c0_11 = arith.constant 0 : index
    %c0_12 = arith.constant 0 : index
    %c0_13 = arith.constant 0 : index
    %11 = vector.load %arg2[%c0_11, %c0_12, %c0_13] : memref<2x16x32xf32, #tpu.memory_space<vmem>>, vector<2x16x32xf32>
    %12 = vector.shape_cast %10 : vector<2x32xf32> to vector<2x1x32xf32>
    %13 = vector.broadcast %12 : vector<2x1x32xf32> to vector<2x16x32xf32>
    %14 = arith.addf %11, %13 : vector<2x16x32xf32>
    %15 = math.tanh %14 : vector<2x16x32xf32>
    %c0_14 = arith.constant 0 : index
    %c0_15 = arith.constant 0 : index
    %16 = vector.load %arg6[%c0_14, %c0_15] : memref<1x32xf32, #tpu.memory_space<vmem>>, vector<1x32xf32>
    %17 = vector.shape_cast %16 : vector<1x32xf32> to vector<1x1x32xf32>
    %18 = vector.broadcast %17 : vector<1x1x32xf32> to vector<2x16x32xf32>
    %19 = arith.mulf %15, %18 : vector<2x16x32xf32>
    %cst_16 = arith.constant dense<0.000000e+00> : vector<2x16xf32>
    %20 = vector.multi_reduction <add>, %19, %cst_16 [2] : vector<2x16x32xf32> to vector<2x16xf32>
    %c0_17 = arith.constant 0 : index
    %c0_18 = arith.constant 0 : index
    %21 = vector.load %arg7[%c0_17, %c0_18] : memref<1x1xf32, #tpu.memory_space<vmem>>, vector<1x1xf32>
    %22 = vector.broadcast %21 : vector<1x1xf32> to vector<2x16xf32>
    %23 = arith.addf %20, %22 : vector<2x16xf32>
    %cst_19 = arith.constant dense<0xFF800000> : vector<2xf32>
    %24 = vector.multi_reduction <maximumf>, %23, %cst_19 [1] : vector<2x16xf32> to vector<2xf32>
    %25 = vector.shape_cast %24 : vector<2xf32> to vector<2x1xf32>
    %26 = vector.broadcast %25 : vector<2x1xf32> to vector<2x16xf32>
    %27 = arith.subf %23, %26 : vector<2x16xf32>
    %28 = math.exp %27 : vector<2x16xf32>
    %cst_20 = arith.constant dense<0.000000e+00> : vector<2xf32>
    %29 = vector.multi_reduction <add>, %28, %cst_20 [1] : vector<2x16xf32> to vector<2xf32>
    %30 = vector.shape_cast %29 : vector<2xf32> to vector<2x1xf32>
    %31 = vector.broadcast %30 : vector<2x1xf32> to vector<2x16xf32>
    %32 = arith.divf %28, %31 : vector<2x16xf32>
    %33 = vector.shape_cast %32 : vector<2x16xf32> to vector<2x16x1xf32>
    %34 = arith.extf %3 : vector<2x16x32xbf16> to vector<2x16x32xf32>
    %35 = vector.broadcast %33 : vector<2x16x1xf32> to vector<2x16x32xf32>
    %36 = arith.mulf %34, %35 : vector<2x16x32xf32>
    %cst_21 = arith.constant dense<0.000000e+00> : vector<2x32xf32>
    %37 = vector.multi_reduction <add>, %36, %cst_21 [1] : vector<2x16x32xf32> to vector<2x32xf32>
    %c0_22 = arith.constant 0 : index
    %c0_23 = arith.constant 0 : index
    %c0_24 = arith.constant 0 : index
    %38 = vector.load %arg3[%c0_22, %c0_23, %c0_24] : memref<1x2x32xf32, #tpu.memory_space<vmem>>, vector<1x2x32xf32>
    %39 = vector.shape_cast %38 : vector<1x2x32xf32> to vector<2x32xf32>
    %40 = arith.truncf %39 : vector<2x32xf32> to vector<2x32xbf16>
    %c0_25 = arith.constant 0 : index
    %c0_26 = arith.constant 0 : index
    %41 = vector.load %arg9[%c0_25, %c0_26] : memref<32x128xbf16, #tpu.memory_space<vmem>>, vector<32x128xbf16>
    %cst_27 = arith.constant dense<0.000000e+00> : vector<2x128xf32>
    %42 = tpu.matmul %40, %41, %cst_27 {dimension_numbers = #tpu.dot_dimension_numbers<[1], [0], [0], [1], [0, 0, 1, 1], [], []>} : vector<2x32xbf16>, vector<32x128xbf16>, vector<2x128xf32> -> vector<2x128xf32>
    %43 = arith.truncf %37 : vector<2x32xf32> to vector<2x32xbf16>
    %c0_28 = arith.constant 0 : index
    %c0_29 = arith.constant 0 : index
    %44 = vector.load %arg10[%c0_28, %c0_29] : memref<32x128xbf16, #tpu.memory_space<vmem>>, vector<32x128xbf16>
    %cst_30 = arith.constant dense<0.000000e+00> : vector<2x128xf32>
    %45 = tpu.matmul %43, %44, %cst_30 {dimension_numbers = #tpu.dot_dimension_numbers<[1], [0], [0], [1], [0, 0, 1, 1], [], []>} : vector<2x32xbf16>, vector<32x128xbf16>, vector<2x128xf32> -> vector<2x128xf32>
    %46 = arith.addf %42, %45 : vector<2x128xf32>
    %c0_31 = arith.constant 0 : index
    %c0_32 = arith.constant 0 : index
    %47 = vector.load %arg11[%c0_31, %c0_32] : memref<32x128xf32, #tpu.memory_space<vmem>>, vector<32x128xf32>
    %cst_33 = arith.constant dense<0.000000e+00> : vector<2x128xf32>
    %48 = tpu.matmul %4, %47, %cst_33 {dimension_numbers = #tpu.dot_dimension_numbers<[1], [0], [0], [1], [0, 0, 1, 1], [], []>} : vector<2x32xf32>, vector<32x128xf32>, vector<2x128xf32> -> vector<2x128xf32>
    %49 = arith.addf %46, %48 : vector<2x128xf32>
    %c0_34 = arith.constant 0 : index
    %c0_35 = arith.constant 0 : index
    %50 = vector.load %arg12[%c0_34, %c0_35] : memref<1x128xf32, #tpu.memory_space<vmem>>, vector<1x128xf32>
    %51 = vector.broadcast %50 : vector<1x128xf32> to vector<2x128xf32>
    %52 = arith.addf %49, %51 : vector<2x128xf32>
    %53 = vector.extract_strided_slice %52 {offsets = [0, 0], sizes = [2, 32], strides = [1, 1]} : vector<2x128xf32> to vector<2x32xf32>
    %54 = arith.negf %53 : vector<2x32xf32>
    %55 = math.exp %54 : vector<2x32xf32>
    %cst_36 = arith.constant 1.000000e+00 : f32
    %56 = vector.broadcast %cst_36 : f32 to vector<2x32xf32>
    %57 = arith.addf %56, %55 : vector<2x32xf32>
    %58 = arith.divf %56, %57 : vector<2x32xf32>
    %59 = vector.extract_strided_slice %52 {offsets = [0, 32], sizes = [2, 32], strides = [1, 1]} : vector<2x128xf32> to vector<2x32xf32>
    %60 = arith.negf %59 : vector<2x32xf32>
    %61 = math.exp %60 : vector<2x32xf32>
    %cst_37 = arith.constant 1.000000e+00 : f32
    %62 = vector.broadcast %cst_37 : f32 to vector<2x32xf32>
    %63 = arith.addf %62, %61 : vector<2x32xf32>
    %64 = arith.divf %62, %63 : vector<2x32xf32>
    %65 = vector.extract_strided_slice %52 {offsets = [0, 64], sizes = [2, 32], strides = [1, 1]} : vector<2x128xf32> to vector<2x32xf32>
    %66 = math.tanh %65 : vector<2x32xf32>
    %67 = vector.extract_strided_slice %52 {offsets = [0, 96], sizes = [2, 32], strides = [1, 1]} : vector<2x128xf32> to vector<2x32xf32>
    %68 = arith.negf %67 : vector<2x32xf32>
    %69 = math.exp %68 : vector<2x32xf32>
    %cst_38 = arith.constant 1.000000e+00 : f32
    %70 = vector.broadcast %cst_38 : f32 to vector<2x32xf32>
    %71 = arith.addf %70, %69 : vector<2x32xf32>
    %72 = arith.divf %70, %71 : vector<2x32xf32>
    %73 = arith.mulf %64, %5 : vector<2x32xf32>
    %74 = arith.mulf %58, %66 : vector<2x32xf32>
    %75 = arith.addf %73, %74 : vector<2x32xf32>
    %76 = math.tanh %75 : vector<2x32xf32>
    %77 = arith.mulf %72, %76 : vector<2x32xf32>
    %c0_39 = arith.constant 0 : index
    %c0_40 = arith.constant 0 : index
    %78 = vector.load %arg15[%c0_39, %c0_40] : memref<2x32xf32, #tpu.memory_space<vmem>>, vector<2x32xf32>
    tpu.vector_store %arg15[%c0_39, %c0_40], %77 {strides = array<i32>} : memref<2x32xf32, #tpu.memory_space<vmem>>, vector<2x32xf32>,
    %c0_41 = arith.constant 0 : index
    %c0_42 = arith.constant 0 : index
    %79 = vector.load %arg16[%c0_41, %c0_42] : memref<2x32xf32, #tpu.memory_space<vmem>>, vector<2x32xf32>
    tpu.vector_store %arg16[%c0_41, %c0_42], %75 {strides = array<i32>} : memref<2x32xf32, #tpu.memory_space<vmem>>, vector<2x32xf32>,
    %c0_43 = arith.constant 0 : index
    %c0_44 = arith.constant 0 : index
    %c0_45 = arith.constant 0 : index
    %80 = vector.load %arg13[%c0_43, %c0_44, %c0_45] : memref<1x2x32xf32, #tpu.memory_space<vmem>>, vector<1x2x32xf32>
    %81 = vector.shape_cast %80 : vector<1x2x32xf32> to vector<2x32xf32>
    %82 = vector.shape_cast %77 : vector<2x32xf32> to vector<1x2x32xf32>
    tpu.vector_store %arg13[%c0_43, %c0_44, %c0_45], %82 {strides = array<i32>} : memref<1x2x32xf32, #tpu.memory_space<vmem>>, vector<1x2x32xf32>,
    %c0_46 = arith.constant 0 : index
    %c0_47 = arith.constant 0 : index
    %c0_48 = arith.constant 0 : index
    %83 = vector.load %arg14[%c0_46, %c0_47, %c0_48] : memref<1x2x16xf32, #tpu.memory_space<vmem>>, vector<1x2x16xf32>
    %84 = vector.shape_cast %83 : vector<1x2x16xf32> to vector<2x16xf32>
    %85 = vector.shape_cast %32 : vector<2x16xf32> to vector<1x2x16xf32>
    tpu.vector_store %arg14[%c0_46, %c0_47, %c0_48], %85 {strides = array<i32>} : memref<1x2x16xf32, #tpu.memory_space<vmem>>, vector<1x2x16xf32>,
    return
  }
  func.func @transform_0(%arg0: i32) -> (i32, i32, i32) {
    %c0_i32 = arith.constant 0 : i32
    %c0_i32_0 = arith.constant 0 : i32
    %c0_i32_1 = arith.constant 0 : i32
    %c0_i32_2 = arith.constant 0 : i32
    return %c0_i32, %c0_i32_0, %c0_i32_1 : i32, i32, i32
  }
  func.func @transform_1(%arg0: i32) -> (i32, i32, i32) {
    %c0_i32 = arith.constant 0 : i32
    %c0_i32_0 = arith.constant 0 : i32
    %c0_i32_1 = arith.constant 0 : i32
    %c0_i32_2 = arith.constant 0 : i32
    return %c0_i32, %c0_i32_0, %c0_i32_1 : i32, i32, i32
  }
  func.func @transform_2(%arg0: i32) -> (i32, i32, i32) {
    %c0_i32 = arith.constant 0 : i32
    %c0_i32_0 = arith.constant 0 : i32
    %c0_i32_1 = arith.constant 0 : i32
    return %arg0, %c0_i32, %c0_i32_0 : i32, i32, i32
  }
  func.func @transform_3(%arg0: i32) -> (i32, i32) {
    %c0_i32 = arith.constant 0 : i32
    %c0_i32_0 = arith.constant 0 : i32
    %c0_i32_1 = arith.constant 0 : i32
    return %c0_i32, %c0_i32_0 : i32, i32
  }
  func.func @transform_4(%arg0: i32) -> (i32, i32) {
    %c0_i32 = arith.constant 0 : i32
    %c0_i32_0 = arith.constant 0 : i32
    %c0_i32_1 = arith.constant 0 : i32
    return %c0_i32, %c0_i32_0 : i32, i32
  }
  func.func @transform_5(%arg0: i32) -> (i32, i32) {
    %c0_i32 = arith.constant 0 : i32
    %c0_i32_0 = arith.constant 0 : i32
    %c0_i32_1 = arith.constant 0 : i32
    return %c0_i32, %c0_i32_0 : i32, i32
  }
  func.func @transform_6(%arg0: i32) -> (i32, i32) {
    %c0_i32 = arith.constant 0 : i32
    %c0_i32_0 = arith.constant 0 : i32
    %c0_i32_1 = arith.constant 0 : i32
    return %c0_i32, %c0_i32_0 : i32, i32
  }
  func.func @transform_7(%arg0: i32) -> (i32, i32) {
    %c0_i32 = arith.constant 0 : i32
    %c0_i32_0 = arith.constant 0 : i32
    %c0_i32_1 = arith.constant 0 : i32
    return %c0_i32, %c0_i32_0 : i32, i32
  }
  func.func @transform_8(%arg0: i32) -> (i32, i32) {
    %c0_i32 = arith.constant 0 : i32
    %c0_i32_0 = arith.constant 0 : i32
    %c0_i32_1 = arith.constant 0 : i32
    return %c0_i32, %c0_i32_0 : i32, i32
  }
  func.func @transform_9(%arg0: i32) -> (i32, i32) {
    %c0_i32 = arith.constant 0 : i32
    %c0_i32_0 = arith.constant 0 : i32
    %c0_i32_1 = arith.constant 0 : i32
    return %c0_i32, %c0_i32_0 : i32, i32
  }
  func.func @transform_10(%arg0: i32) -> (i32, i32) {
    %c0_i32 = arith.constant 0 : i32
    %c0_i32_0 = arith.constant 0 : i32
    %c0_i32_1 = arith.constant 0 : i32
    return %c0_i32, %c0_i32_0 : i32, i32
  }
  func.func @transform_11(%arg0: i32) -> (i32, i32) {
    %c0_i32 = arith.constant 0 : i32
    %c0_i32_0 = arith.constant 0 : i32
    %c0_i32_1 = arith.constant 0 : i32
    return %c0_i32, %c0_i32_0 : i32, i32
  }
  func.func @transform_12(%arg0: i32) -> (i32, i32, i32) {
    %c0_i32 = arith.constant 0 : i32
    %c0_i32_0 = arith.constant 0 : i32
    %c0_i32_1 = arith.constant 0 : i32
    return %arg0, %c0_i32, %c0_i32_0 : i32, i32, i32
  }
  func.func @transform_13(%arg0: i32) -> (i32, i32, i32) {
    %c0_i32 = arith.constant 0 : i32
    %c0_i32_0 = arith.constant 0 : i32
    %c0_i32_1 = arith.constant 0 : i32
    return %arg0, %c0_i32, %c0_i32_0 : i32, i32, i32
  }
}

module attributes {stable_mosaic.version = 11 : i64} {
  func.func @_vocab_proj_kernel(%arg0: i32, %arg1: i32, %arg2: memref<16x32xbf16, #tpu.memory_space<vmem>>, %arg3: memref<32x128xbf16, #tpu.memory_space<vmem>>, %arg4: memref<1x128xf32, #tpu.memory_space<vmem>>, %arg5: memref<16x128xf32, #tpu.memory_space<vmem>>) attributes {dimension_semantics = [#tpu.dimension_semantics<parallel>, #tpu.dimension_semantics<parallel>], iteration_bounds = array<i64: 1, 1>, scalar_prefetch = 0 : i64, scratch_operands = 0 : i64, tpu.core_type = #tpu.core_type<tc>, window_params = [{transform_indices = @transform_0, window_bounds = array<i64: 16, 32>}, {transform_indices = @transform_1, window_bounds = array<i64: 32, 128>}, {transform_indices = @transform_2, window_bounds = array<i64: 1, 128>}, {transform_indices = @transform_3, window_bounds = array<i64: 16, 128>}]} {
    %c0 = arith.constant 0 : index
    %c0_0 = arith.constant 0 : index
    %0 = vector.load %arg2[%c0, %c0_0] : memref<16x32xbf16, #tpu.memory_space<vmem>>, vector<16x32xbf16>
    %c0_1 = arith.constant 0 : index
    %c0_2 = arith.constant 0 : index
    %1 = vector.load %arg3[%c0_1, %c0_2] : memref<32x128xbf16, #tpu.memory_space<vmem>>, vector<32x128xbf16>
    %cst = arith.constant dense<0.000000e+00> : vector<16x128xf32>
    %2 = tpu.matmul %0, %1, %cst {dimension_numbers = #tpu.dot_dimension_numbers<[1], [0], [0], [1], [0, 0, 1, 1], [], []>} : vector<16x32xbf16>, vector<32x128xbf16>, vector<16x128xf32> -> vector<16x128xf32>
    %c0_3 = arith.constant 0 : index
    %c0_4 = arith.constant 0 : index
    %3 = vector.load %arg4[%c0_3, %c0_4] : memref<1x128xf32, #tpu.memory_space<vmem>>, vector<1x128xf32>
    %4 = vector.broadcast %3 : vector<1x128xf32> to vector<16x128xf32>
    %5 = arith.addf %2, %4 : vector<16x128xf32>
    %c0_5 = arith.constant 0 : index
    %c0_6 = arith.constant 0 : index
    %6 = vector.load %arg5[%c0_5, %c0_6] : memref<16x128xf32, #tpu.memory_space<vmem>>, vector<16x128xf32>
    tpu.vector_store %arg5[%c0_5, %c0_6], %5 {strides = array<i32>} : memref<16x128xf32, #tpu.memory_space<vmem>>, vector<16x128xf32>,
    return
  }
  func.func @transform_0(%arg0: i32, %arg1: i32) -> (i32, i32) {
    %c0_i32 = arith.constant 0 : i32
    %c0_i32_0 = arith.constant 0 : i32
    return %arg0, %c0_i32 : i32, i32
  }
  func.func @transform_1(%arg0: i32, %arg1: i32) -> (i32, i32) {
    %c0_i32 = arith.constant 0 : i32
    %c0_i32_0 = arith.constant 0 : i32
    return %c0_i32, %arg1 : i32, i32
  }
  func.func @transform_2(%arg0: i32, %arg1: i32) -> (i32, i32) {
    %c0_i32 = arith.constant 0 : i32
    %c0_i32_0 = arith.constant 0 : i32
    return %c0_i32, %arg1 : i32, i32
  }
  func.func @transform_3(%arg0: i32, %arg1: i32) -> (i32, i32) {
    %c0_i32 = arith.constant 0 : i32
    return %arg0, %arg1 : i32, i32
  }
}

</mosaic_0001>

<llo_original>
// kernel: encoder_decoder_forward.3
$region0: #{encoder_decoder_forward.3}
  #allocation0 [shape = 'u32[]', space=smem, size = 0x4, offset = 0x4, fixed_abs, tag = 'smem constant byte address 0x4 - core index']
  #allocation1 [shape = 'u32[72,128]{1,0:T(1,128)}', space=vmem, size = 0x9000, scoped, tag = 'internal scratch']
  %s0 = inlined_call_operand.vmem [shape: bf16[32,64], index: 0, kind: input, shape index: {}]
  %s1 = inlined_call_operand.vmem [shape: bf16[64,32], index: 1, kind: input, shape index: {}]
  %s2 = inlined_call_operand.vmem [shape: f32[1,32], index: 2, kind: input, shape index: {}]
  %s3 = inlined_call_operand.vmem [shape: f32[32,32], index: 3, kind: output, shape index: {}]
  %s4 = sld [smem:[#allocation0]]
  $region22: #{encoder_decoder_forward.3} parent=0
    _
  %s6 = ssub.s32 1, %s4
  %s7 = scalar_select 0, %s6, %s4
  // Predicated region
  $region2: #{encoder_decoder_forward.3} parent=0 // pred_check
    _
  $region3: #{encoder_decoder_forward.3} parent=0 // pred_check_branch
    %9 = sbr.rel (0) target = $region5
  $region4: #{encoder_decoder_forward.3} parent=0 // pred_region
    _
  $region5: #{encoder_decoder_forward.3} parent=0 // pred_fallthru
    _
  // Predicated region
  $region6: #{encoder_decoder_forward.3} parent=0 // pred_check
    _
  $region7: #{encoder_decoder_forward.3} parent=0 // pred_check_branch
    %11 = sbr.rel (0) target = $region9
  $region8: #{encoder_decoder_forward.3} parent=0 // pred_region
    _
  $region9: #{encoder_decoder_forward.3} parent=0 // pred_fallthru
    _
  // Predicated region
  $region10: #{encoder_decoder_forward.3} parent=0 // pred_check
    _
  $region11: #{encoder_decoder_forward.3} parent=0 // pred_check_branch
    %13 = sbr.rel (0) target = $region13
  $region12: #{encoder_decoder_forward.3} parent=0 // pred_region
    _
  $region13: #{encoder_decoder_forward.3} parent=0 // pred_fallthru
    _
  %v15 = vld [vmem:[%s0] sm:$0xf]
  %v16 = vld [vmem:[%s0 + $0x4] sm:$0xf]
  %v17 = vld [vmem:[%s0 + $0x8] sm:$0xf]
  %v18 = vld [vmem:[%s0 + $0xc] sm:$0xf]
  %v19 = vld [vmem:[%s1] sm:$0xf]
  %v20 = vld [vmem:[%s1 + $0x4] sm:$0xf]
  %v21 = vld [vmem:[%s1 + $0x8] sm:$0xf]
  %v22 = vld [vmem:[%s1 + $0xc] sm:$0xf]
  %v23 = vld [vmem:[%s1 + $0x10] sm:$0xf]
  %v24 = vld [vmem:[%s1 + $0x14] sm:$0xf]
  %v25 = vld [vmem:[%s1 + $0x18] sm:$0xf]
  %v26 = vld [vmem:[%s1 + $0x1c] sm:$0xf]
  %v27 = vld [vmem:[%s2] sm:$0x1]
  %v29 = vperm.slane %v27, 0
  %v35 = vunpack.c.l.b16 %v15
  %v36 = vunpack.c.l.b16 %v16
  %v37 = vunpack.c.l.b16 %v17
  %v38 = vunpack.c.l.b16 %v18
  %v39 = vpack.c.b16 %v36, %v35
  %v40 = vpack.c.b16 %v38, %v37
  %v49 = vunpack.c.l.b16 %v19
  %v50 = vunpack.c.l.b16 %v20
  %v51 = vunpack.c.l.b16 %v21
  %v52 = vunpack.c.l.b16 %v22
  %v53 = vunpack.c.l.b16 %v23
  %v54 = vunpack.c.l.b16 %v24
  %v55 = vunpack.c.l.b16 %v25
  %v56 = vunpack.c.l.b16 %v26
  %v57 = vpack.c.b16 %v50, %v49
  %v58 = vpack.c.b16 %v52, %v51
  %v59 = vpack.c.b16 %v54, %v53
  %v60 = vpack.c.b16 %v56, %v55
  %vm65 = vcmask 523264
  %v67 = vsel %vm65, %v39, 0
  %v70 = vsel %vm65, %v40, 0
  %72 = vmatpush.bf16.msra.mxu0 0
  %73 = vmatpush.bf16.msra.mxu0 0
  %74 = vmatpush.bf16.msra.mxu0 0
  %75 = vmatpush.bf16.msra.mxu0 0
  %76 = vmatpush.bf16.msra.mxu0 %v60
  %77 = vmatpush.bf16.msra.mxu0 %v59
  %78 = vmatpush.bf16.msra.mxu0 %v58
  %79 = vmatpush.bf16.msra.mxu0 %v57
  %80 = vmatmul.bf16.gmra.mxu0 %v67
  %v81 = vpop.f32.mrf.mxu0
  %v82 = vadd.f32 %v29, %v81
  %v83 = vpop.f32.mrf.mxu0
  %v84 = vadd.f32 %v29, %v83
  %85 = vmatmul.bf16.gmra.mxu0 %v70
  %v86 = vpop.f32.mrf.mxu0
  %v87 = vadd.f32 %v29, %v86
  %v88 = vpop.f32.mrf.mxu0
  %v89 = vadd.f32 %v29, %v88
  %90 = vdwg.mxu0
  %vm91 = vcmask 261120
  %92 = vst.msk [vmem:[%s3] sm:$0xff] %vm91, %v82
  %93 = vst.msk [vmem:[%s3 + $0x8] sm:$0xff] %vm91, %v84
  %94 = vst.msk [vmem:[%s3 + $0x10] sm:$0xff] %vm91, %v87
  %95 = vst.msk [vmem:[%s3 + $0x18] sm:$0xff] %vm91, %v89
  // Predicated region
  $region14: #{encoder_decoder_forward.3} parent=0 // pred_check
    _
  $region15: #{encoder_decoder_forward.3} parent=0 // pred_check_branch
    %97 = sbr.rel (0) target = $region17
  $region16: #{encoder_decoder_forward.3} parent=0 // pred_region
    _
  $region17: #{encoder_decoder_forward.3} parent=0 // pred_fallthru
    _
  // Predicated region
  $region18: #{encoder_decoder_forward.3} parent=0 // pred_check
    _
  $region19: #{encoder_decoder_forward.3} parent=0 // pred_check_branch
    %99 = sbr.rel (0) target = $region21
  $region20: #{encoder_decoder_forward.3} parent=0 // pred_region
    _
  $region21: #{encoder_decoder_forward.3} parent=0 // pred_fallthru
    _

// kernel: encoder_decoder_forward.5
$region0: #{encoder_decoder_forward.5}
  #allocation0 [shape = 'u32[]', space=smem, size = 0x4, offset = 0x4, fixed_abs, tag = 'smem constant byte address 0x4 - core index']
  #allocation1 [shape = 'u32[72,128]{1,0:T(1,128)}', space=vmem, size = 0x9000, scoped, tag = 'internal scratch']
  %s0 = inlined_call_operand.vmem [shape: bf16[16,32], index: 0, kind: input, shape index: {}]
  %s1 = inlined_call_operand.vmem [shape: bf16[32,128], index: 1, kind: input, shape index: {}]
  %s2 = inlined_call_operand.vmem [shape: f32[1,128], index: 2, kind: input, shape index: {}]
  %s3 = inlined_call_operand.vmem [shape: f32[16,128], index: 3, kind: output, shape index: {}]
  %s4 = sld [smem:[#allocation0]]
  $region22: #{encoder_decoder_forward.5} parent=0
    _
  %s6 = ssub.s32 1, %s4
  %s7 = scalar_select 0, %s6, %s4
  // Predicated region
  $region2: #{encoder_decoder_forward.5} parent=0 // pred_check
    _
  $region3: #{encoder_decoder_forward.5} parent=0 // pred_check_branch
    %9 = sbr.rel (0) target = $region5
  $region4: #{encoder_decoder_forward.5} parent=0 // pred_region
    _
  $region5: #{encoder_decoder_forward.5} parent=0 // pred_fallthru
    _
  // Predicated region
  $region6: #{encoder_decoder_forward.5} parent=0 // pred_check
    _
  $region7: #{encoder_decoder_forward.5} parent=0 // pred_check_branch
    %11 = sbr.rel (0) target = $region9
  $region8: #{encoder_decoder_forward.5} parent=0 // pred_region
    _
  $region9: #{encoder_decoder_forward.5} parent=0 // pred_fallthru
    _
  // Predicated region
  $region10: #{encoder_decoder_forward.5} parent=0 // pred_check
    _
  $region11: #{encoder_decoder_forward.5} parent=0 // pred_check_branch
    %13 = sbr.rel (0) target = $region13
  $region12: #{encoder_decoder_forward.5} parent=0 // pred_region
    _
  $region13: #{encoder_decoder_forward.5} parent=0 // pred_fallthru
    _
  %v15 = vld [vmem:[%s0] sm:$0xf]
  %v16 = vld [vmem:[%s0 + $0x4] sm:$0xf]
  %v17 = vld [vmem:[%s1] sm:$0xf]
  %v18 = vld [vmem:[%s1 + $0x4] sm:$0xf]
  %v19 = vld [vmem:[%s1 + $0x8] sm:$0xf]
  %v20 = vld [vmem:[%s1 + $0xc] sm:$0xf]
  %v21 = vld [vmem:[%s2] sm:$0x1]
  %v23 = vperm.slane %v21, 0
  %v27 = vunpack.c.l.b16 %v15
  %v28 = vunpack.c.l.b16 %v16
  %v29 = vpack.c.b16 %v28, %v27
  %v34 = vunpack.c.l.b16 %v17
  %v35 = vunpack.c.l.b16 %v18
  %v36 = vunpack.c.l.b16 %v19
  %v37 = vunpack.c.l.b16 %v20
  %v38 = vpack.c.b16 %v35, %v34
  %v39 = vpack.c.b16 %v37, %v36
  %vm42 = vcmask 261120
  %v44 = vsel %vm42, %v29, 0
  %46 = vmatpush.bf16.msra.mxu0 0
  %47 = vmatpush.bf16.msra.mxu0 0
  %48 = vmatpush.bf16.msra.mxu0 0
  %49 = vmatpush.bf16.msra.mxu0 0
  %50 = vmatpush.bf16.msra.mxu0 0
  %51 = vmatpush.bf16.msra.mxu0 0
  %52 = vmatpush.bf16.msra.mxu0 %v39
  %53 = vmatpush.bf16.msra.mxu0 %v38
  %54 = vmatmul.bf16.gmra.mxu0 %v44
  %v55 = vpop.f32.mrf.mxu0
  %v56 = vadd.f32 %v23, %v55
  %v57 = vpop.f32.mrf.mxu0
  %v58 = vadd.f32 %v23, %v57
  %59 = vdwg.mxu0
  %60 = vst [vmem:[%s3] sm:$0xff] %v56
  %61 = vst [vmem:[%s3 + $0x8] sm:$0xff] %v58
  // Predicated region
  $region14: #{encoder_decoder_forward.5} parent=0 // pred_check
    _
  $region15: #{encoder_decoder_forward.5} parent=0 // pred_check_branch
    %63 = sbr.rel (0) target = $region17
  $region16: #{encoder_decoder_forward.5} parent=0 // pred_region
    _
  $region17: #{encoder_decoder_forward.5} parent=0 // pred_fallthru
    _
  // Predicated region
  $region18: #{encoder_decoder_forward.5} parent=0 // pred_check
    _
  $region19: #{encoder_decoder_forward.5} parent=0 // pred_check_branch
    %65 = sbr.rel (0) target = $region21
  $region20: #{encoder_decoder_forward.5} parent=0 // pred_region
    _
  $region21: #{encoder_decoder_forward.5} parent=0 // pred_fallthru
    _

// kernel: encoder_decoder_forward.4
$region0: #{encoder_decoder_forward.4}
  #allocation0 [shape = 'u32[]', space=smem, size = 0x4, offset = 0x4, fixed_abs, tag = 'smem constant byte address 0x4 - core index']
  #allocation1 [shape = 'u32[72,128]{1,0:T(1,128)}', space=vmem, size = 0x9000, scoped, tag = 'internal scratch']
  #allocation2 [shape = 'f32[2,32]{1,0:T(2,128)}', space=vmem, size = 0x400, scoped, tag = 'scratch operand']
  #allocation3 [shape = 'f32[2,32]{1,0:T(2,128)}', space=vmem, size = 0x400, scoped, tag = 'scratch operand']
  #allocation4 [shape = 'f32[1,1]{1,0:T(1,128)S(1)}', space=vmem, size = 0x200, scoped, tag = 'scoped memory for encoder_decoder_forward.4']
  %s0 = inlined_call_operand.vmem [shape: bf16[2,16,32], index: 0, kind: input, shape index: {}]
  %s1 = inlined_call_operand.vmem [shape: f32[2,16,32], index: 1, kind: input, shape index: {}]
  %s2 = inlined_call_operand.vmem [shape: f32[7,2,32], index: 2, kind: input, shape index: {}]
  %s3 = inlined_call_operand.vmem [shape: f32[32,32], index: 3, kind: input, shape index: {}]
  %s4 = inlined_call_operand.vmem [shape: f32[1,32], index: 4, kind: input, shape index: {}]
  %s5 = inlined_call_operand.vmem [shape: f32[1,32], index: 5, kind: input, shape index: {}]
  %s6 = inlined_call_operand.<no memory space> [shape: f32[1,1], index: 6, kind: input, shape index: {}]
  %s7 = inlined_call_operand.vmem [shape: f32[2,64], index: 7, kind: input, shape index: {}]
  %s8 = inlined_call_operand.vmem [shape: bf16[32,128], index: 8, kind: input, shape index: {}]
  %s9 = inlined_call_operand.vmem [shape: bf16[32,128], index: 9, kind: input, shape index: {}]
  %s10 = inlined_call_operand.vmem [shape: f32[32,128], index: 10, kind: input, shape index: {}]
  %s11 = inlined_call_operand.vmem [shape: f32[1,128], index: 11, kind: input, shape index: {}]
  %s12 = inlined_call_operand.vmem [shape: f32[7,2,32], index: 12, kind: output, shape index: {0}]
  %s13 = inlined_call_operand.hbm [shape: f32[7,2,16], index: 13, kind: output, shape index: {1}]
  %14 = xla_tuple %s12, %s13
  %s15 = sld [smem:[#allocation0]]
  $region93: #{encoder_decoder_forward.4} parent=0
    _
  %s17 = ssub.s32 1, %s15
  %s18 = scalar_select 0, %s17, %s15
  %v19 = vstv %s6
  %20 = vst [vmem:[#allocation4] sm:$0x1] %v19
  $region1: #{encoder_decoder_forward.4} parent=0
    #allocation5 [shape = 'u8[2048]{0}', space=vmem, size = 0x800, scoped, tag = 'output window, operand 1']
    #allocation6 [shape = 's32[2]{0}', space=sflag, size = 0x8, scoped, tag = 'scoped memory for encoder_decoder_forward.4']
    %21 = vsyncpa [#allocation6], 0
    %s22 = scalar_lea.sflag [#allocation6], 1
    %23 = vsyncpa %s22, 0
    loop: start=0, step=1, limit=9
    $region2: #{encoder_decoder_forward.4} parent=1 // loop_pre_header
      _
    $region3: #{encoder_decoder_forward.4} parent=1 // loop_header
      %s25 = sphi 0, %s29
      %p26 = scmp.ge.s32.totalorder %s25, 9
      %s33 = sphi 0, %s33
      %s35 = sphi 0, %s33
      %s36 = sphi 0, %s35
      %s50 = sphi 0, %s36
      %s54 = sphi 0, %s54
      %s56 = sphi 0, %s54
      %s57 = sphi 0, %s56
      %s71 = sphi 0, %s57
      %s77 = sphi 0, %s79
      %s80 = sphi 0, %s77
      %s81 = sphi 0, %s80
      %s97 = sphi 0, %s81
      %s101 = sphi 0, %s101
      %s103 = sphi 0, %s101
      %s104 = sphi 0, %s103
      %s118 = sphi 0, %s104
      %s122 = sphi 0, %s122
      %s124 = sphi 0, %s122
      %s125 = sphi 0, %s124
      %s139 = sphi 0, %s125
      %s143 = sphi 0, %s143
      %s145 = sphi 0, %s143
      %s146 = sphi 0, %s145
      %s160 = sphi 0, %s146
      %s164 = sphi 0, %s164
      %s166 = sphi 0, %s164
      %s167 = sphi 0, %s166
      %s181 = sphi 0, %s167
      %s185 = sphi 0, %s185
      %s187 = sphi 0, %s185
      %s188 = sphi 0, %s187
      %s202 = sphi 0, %s188
      %s206 = sphi 0, %s206
      %s208 = sphi 0, %s206
      %s209 = sphi 0, %s208
      %s223 = sphi 0, %s209
      %s227 = sphi 0, %s227
      %s229 = sphi 0, %s227
      %s230 = sphi 0, %s229
      %s244 = sphi 0, %s230
      %s248 = sphi 0, %s248
      %s250 = sphi 0, %s248
      %s251 = sphi 0, %s250
      %s265 = sphi 0, %s251
      %s269 = sphi 0, %s269
      %s271 = sphi 0, %s269
      %s272 = sphi 0, %s271
      %s286 = sphi 0, %s272
      %s292 = sphi 0, %s294
      %s295 = sphi 0, %s292
      %s296 = sphi 0, %s295
      %s312 = sphi 0, %s296
      %s318 = sphi 0, %s320
      %s321 = sphi 0, %s318
      %s322 = sphi 0, %s321
      %s338 = sphi 0, %s322
    $region4: #{encoder_decoder_forward.4} parent=1 // loop_header_branch
      %28 = sbr.rel (%p26) target = $region8
    $region5: #{encoder_decoder_forward.4} parent=1 // loop_body
      %s30 = ssub.s32 %s25, 1
      %s31 = ssub.s32 %s25, 2
      %s32 = sadd.s32 %s25, 1
      %s34 = sadd.s32 %s33, 1
      %p37 = scmp.eq.s32.totalorder %s25, 6
      %p38 = scmp.ne.s32.totalorder %s33, %s35
      %p39 = scmp.eq.s32.totalorder %s25, 0
      %p40 = por %p38, %p39
      %p41 = scmp.ne.s32.totalorder %s33, %s35
      %p42 = scmp.eq.s32.totalorder %s30, 6
      %p43 = por %p41, %p42
      %p44 = scmp.ne.s32.totalorder %s35, %s36
      %p45 = scmp.eq.s32.totalorder %s30, 0
      %p46 = por %p44, %p45
      %p47 = scmp.ne.s32.totalorder %s35, %s36
      %p48 = scmp.eq.s32.totalorder %s31, 6
      %p49 = por %p47, %p48
      %p51 = scmp.ne.s32.totalorder %s36, %s50
      %p52 = scmp.eq.s32.totalorder %s31, 0
      %p53 = por %p51, %p52
      %s55 = sadd.s32 %s54, 1
      %p58 = scmp.eq.s32.totalorder %s25, 6
      %p59 = scmp.ne.s32.totalorder %s54, %s56
      %p60 = scmp.eq.s32.totalorder %s25, 0
      %p61 = por %p59, %p60
      %p62 = scmp.ne.s32.totalorder %s54, %s56
      %p63 = scmp.eq.s32.totalorder %s30, 6
      %p64 = por %p62, %p63
      %p65 = scmp.ne.s32.totalorder %s56, %s57
      %p66 = scmp.eq.s32.totalorder %s30, 0
      %p67 = por %p65, %p66
      %p68 = scmp.ne.s32.totalorder %s56, %s57
      %p69 = scmp.eq.s32.totalorder %s31, 6
      %p70 = por %p68, %p69
      %p72 = scmp.ne.s32.totalorder %s57, %s71
      %p73 = scmp.eq.s32.totalorder %s31, 0
      %p74 = por %p72, %p73
      %s75 = ssub.s32 %s25, %s32
      %p76 = scmp.eq.s32.totalorder %s75, 0
      %s78 = sadd.s32 %s77, 1
      %s79 = scalar_select %p76, %s77, %s78
      %p82 = pneg %p76
      %p83 = scmp.eq.s32.totalorder %s25, 6
      %p84 = por %p82, %p83
      %p85 = scmp.ne.s32.totalorder %s77, %s80
      %p86 = scmp.eq.s32.totalorder %s25, 0
      %p87 = por %p85, %p86
      %p88 = scmp.ne.s32.totalorder %s77, %s80
      %p89 = scmp.eq.s32.totalorder %s30, 6
      %p90 = por %p88, %p89
      %p91 = scmp.ne.s32.totalorder %s80, %s81
      %p92 = scmp.eq.s32.totalorder %s30, 0
      %p93 = por %p91, %p92
      %p94 = scmp.ne.s32.totalorder %s80, %s81
      %p95 = scmp.eq.s32.totalorder %s31, 6
      %p96 = por %p94, %p95
      %p98 = scmp.ne.s32.totalorder %s81, %s97
      %p99 = scmp.eq.s32.totalorder %s31, 0
      %p100 = por %p98, %p99
      %s102 = sadd.s32 %s101, 1
      %p105 = scmp.eq.s32.totalorder %s25, 6
      %p106 = scmp.ne.s32.totalorder %s101, %s103
      %p107 = scmp.eq.s32.totalorder %s25, 0
      %p108 = por %p106, %p107
      %p109 = scmp.ne.s32.totalorder %s101, %s103
      %p110 = scmp.eq.s32.totalorder %s30, 6
      %p111 = por %p109, %p110
      %p112 = scmp.ne.s32.totalorder %s103, %s104
      %p113 = scmp.eq.s32.totalorder %s30, 0
      %p114 = por %p112, %p113
      %p115 = scmp.ne.s32.totalorder %s103, %s104
      %p116 = scmp.eq.s32.totalorder %s31, 6
      %p117 = por %p115, %p116
      %p119 = scmp.ne.s32.totalorder %s104, %s118
      %p120 = scmp.eq.s32.totalorder %s31, 0
      %p121 = por %p119, %p120
      %s123 = sadd.s32 %s122, 1
      %p126 = scmp.eq.s32.totalorder %s25, 6
      %p127 = scmp.ne.s32.totalorder %s122, %s124
      %p128 = scmp.eq.s32.totalorder %s25, 0
      %p129 = por %p127, %p128
      %p130 = scmp.ne.s32.totalorder %s122, %s124
      %p131 = scmp.eq.s32.totalorder %s30, 6
      %p132 = por %p130, %p131
      %p133 = scmp.ne.s32.totalorder %s124, %s125
      %p134 = scmp.eq.s32.totalorder %s30, 0
      %p135 = por %p133, %p134
      %p136 = scmp.ne.s32.totalorder %s124, %s125
      %p137 = scmp.eq.s32.totalorder %s31, 6
      %p138 = por %p136, %p137
      %p140 = scmp.ne.s32.totalorder %s125, %s139
      %p141 = scmp.eq.s32.totalorder %s31, 0
      %p142 = por %p140, %p141
      %s144 = sadd.s32 %s143, 1
      %p147 = scmp.eq.s32.totalorder %s25, 6
      %p148 = scmp.ne.s32.totalorder %s143, %s145
      %p149 = scmp.eq.s32.totalorder %s25, 0
      %p150 = por %p148, %p149
      %p151 = scmp.ne.s32.totalorder %s143, %s145
      %p152 = scmp.eq.s32.totalorder %s30, 6
      %p153 = por %p151, %p152
      %p154 = scmp.ne.s32.totalorder %s145, %s146
      %p155 = scmp.eq.s32.totalorder %s30, 0
      %p156 = por %p154, %p155
      %p157 = scmp.ne.s32.totalorder %s145, %s146
      %p158 = scmp.eq.s32.totalorder %s31, 6
      %p159 = por %p157, %p158
      %p161 = scmp.ne.s32.totalorder %s146, %s160
      %p162 = scmp.eq.s32.totalorder %s31, 0
      %p163 = por %p161, %p162
      %s165 = sadd.s32 %s164, 1
      %p168 = scmp.eq.s32.totalorder %s25, 6
      %p169 = scmp.ne.s32.totalorder %s164, %s166
      %p170 = scmp.eq.s32.totalorder %s25, 0
      %p171 = por %p169, %p170
      %p172 = scmp.ne.s32.totalorder %s164, %s166
      %p173 = scmp.eq.s32.totalorder %s30, 6
      %p174 = por %p172, %p173
      %p175 = scmp.ne.s32.totalorder %s166, %s167
      %p176 = scmp.eq.s32.totalorder %s30, 0
      %p177 = por %p175, %p176
      %p178 = scmp.ne.s32.totalorder %s166, %s167
      %p179 = scmp.eq.s32.totalorder %s31, 6
      %p180 = por %p178, %p179
      %p182 = scmp.ne.s32.totalorder %s167, %s181
      %p183 = scmp.eq.s32.totalorder %s31, 0
      %p184 = por %p182, %p183
      %s186 = sadd.s32 %s185, 1
      %p189 = scmp.eq.s32.totalorder %s25, 6
      %p190 = scmp.ne.s32.totalorder %s185, %s187
      %p191 = scmp.eq.s32.totalorder %s25, 0
      %p192 = por %p190, %p191
      %p193 = scmp.ne.s32.totalorder %s185, %s187
      %p194 = scmp.eq.s32.totalorder %s30, 6
      %p195 = por %p193, %p194
      %p196 = scmp.ne.s32.totalorder %s187, %s188
      %p197 = scmp.eq.s32.totalorder %s30, 0
      %p198 = por %p196, %p197
      %p199 = scmp.ne.s32.totalorder %s187, %s188
      %p200 = scmp.eq.s32.totalorder %s31, 6
      %p201 = por %p199, %p200
      %p203 = scmp.ne.s32.totalorder %s188, %s202
      %p204 = scmp.eq.s32.totalorder %s31, 0
      %p205 = por %p203, %p204
      %s207 = sadd.s32 %s206, 1
      %p210 = scmp.eq.s32.totalorder %s25, 6
      %p211 = scmp.ne.s32.totalorder %s206, %s208
      %p212 = scmp.eq.s32.totalorder %s25, 0
      %p213 = por %p211, %p212
      %p214 = scmp.ne.s32.totalorder %s206, %s208
      %p215 = scmp.eq.s32.totalorder %s30, 6
      %p216 = por %p214, %p215
      %p217 = scmp.ne.s32.totalorder %s208, %s209
      %p218 = scmp.eq.s32.totalorder %s30, 0
      %p219 = por %p217, %p218
      %p220 = scmp.ne.s32.totalorder %s208, %s209
      %p221 = scmp.eq.s32.totalorder %s31, 6
      %p222 = por %p220, %p221
      %p224 = scmp.ne.s32.totalorder %s209, %s223
      %p225 = scmp.eq.s32.totalorder %s31, 0
      %p226 = por %p224, %p225
      %s228 = sadd.s32 %s227, 1
      %p231 = scmp.eq.s32.totalorder %s25, 6
      %p232 = scmp.ne.s32.totalorder %s227, %s229
      %p233 = scmp.eq.s32.totalorder %s25, 0
      %p234 = por %p232, %p233
      %p235 = scmp.ne.s32.totalorder %s227, %s229
      %p236 = scmp.eq.s32.totalorder %s30, 6
      %p237 = por %p235, %p236
      %p238 = scmp.ne.s32.totalorder %s229, %s230
      %p239 = scmp.eq.s32.totalorder %s30, 0
      %p240 = por %p238, %p239
      %p241 = scmp.ne.s32.totalorder %s229, %s230
      %p242 = scmp.eq.s32.totalorder %s31, 6
      %p243 = por %p241, %p242
      %p245 = scmp.ne.s32.totalorder %s230, %s244
      %p246 = scmp.eq.s32.totalorder %s31, 0
      %p247 = por %p245, %p246
      %s249 = sadd.s32 %s248, 1
      %p252 = scmp.eq.s32.totalorder %s25, 6
      %p253 = scmp.ne.s32.totalorder %s248, %s250
      %p254 = scmp.eq.s32.totalorder %s25, 0
      %p255 = por %p253, %p254
      %p256 = scmp.ne.s32.totalorder %s248, %s250
      %p257 = scmp.eq.s32.totalorder %s30, 6
      %p258 = por %p256, %p257
      %p259 = scmp.ne.s32.totalorder %s250, %s251
      %p260 = scmp.eq.s32.totalorder %s30, 0
      %p261 = por %p259, %p260
      %p262 = scmp.ne.s32.totalorder %s250, %s251
      %p263 = scmp.eq.s32.totalorder %s31, 6
      %p264 = por %p262, %p263
      %p266 = scmp.ne.s32.totalorder %s251, %s265
      %p267 = scmp.eq.s32.totalorder %s31, 0
      %p268 = por %p266, %p267
      %s270 = sadd.s32 %s269, 1
      %p273 = scmp.eq.s32.totalorder %s25, 6
      %p274 = scmp.ne.s32.totalorder %s269, %s271
      %p275 = scmp.eq.s32.totalorder %s25, 0
      %p276 = por %p274, %p275
      %p277 = scmp.ne.s32.totalorder %s269, %s271
      %p278 = scmp.eq.s32.totalorder %s30, 6
      %p279 = por %p277, %p278
      %p280 = scmp.ne.s32.totalorder %s271, %s272
      %p281 = scmp.eq.s32.totalorder %s30, 0
      %p282 = por %p280, %p281
      %p283 = scmp.ne.s32.totalorder %s271, %s272
      %p284 = scmp.eq.s32.totalorder %s31, 6
      %p285 = por %p283, %p284
      %p287 = scmp.ne.s32.totalorder %s272, %s286
      %p288 = scmp.eq.s32.totalorder %s31, 0
      %p289 = por %p287, %p288
      %s290 = ssub.s32 %s25, %s32
      %p291 = scmp.eq.s32.totalorder %s290, 0
      %s293 = sadd.s32 %s292, 1
      %s294 = scalar_select %p291, %s292, %s293
      %p297 = pneg %p291
      %p298 = scmp.eq.s32.totalorder %s25, 6
      %p299 = por %p297, %p298
      %p300 = scmp.ne.s32.totalorder %s292, %s295
      %p301 = scmp.eq.s32.totalorder %s25, 0
      %p302 = por %p300, %p301
      %p303 = scmp.ne.s32.totalorder %s292, %s295
      %p304 = scmp.eq.s32.totalorder %s30, 6
      %p305 = por %p303, %p304
      %p306 = scmp.ne.s32.totalorder %s295, %s296
      %p307 = scmp.eq.s32.totalorder %s30, 0
      %p308 = por %p306, %p307
      %p309 = scmp.ne.s32.totalorder %s295, %s296
      %p310 = scmp.eq.s32.totalorder %s31, 6
      %p311 = por %p309, %p310
      %p313 = scmp.ne.s32.totalorder %s296, %s312
      %p314 = scmp.eq.s32.totalorder %s31, 0
      %p315 = por %p313, %p314
      %s316 = ssub.s32 %s25, %s32
      %p317 = scmp.eq.s32.totalorder %s316, 0
      %s319 = sadd.s32 %s318, 1
      %s320 = scalar_select %p317, %s318, %s319
      %p323 = pneg %p317
      %p324 = scmp.eq.s32.totalorder %s25, 6
      %p325 = por %p323, %p324
      %p326 = scmp.ne.s32.totalorder %s318, %s321
      %p327 = scmp.eq.s32.totalorder %s25, 0
      %p328 = por %p326, %p327
      %p329 = scmp.ne.s32.totalorder %s318, %s321
      %p330 = scmp.eq.s32.totalorder %s30, 6
      %p331 = por %p329, %p330
      %p332 = scmp.ne.s32.totalorder %s321, %s322
      %p333 = scmp.eq.s32.totalorder %s30, 0
      %p334 = por %p332, %p333
      %p335 = scmp.ne.s32.totalorder %s321, %s322
      %p336 = scmp.eq.s32.totalorder %s31, 6
      %p337 = por %p335, %p336
      %p339 = scmp.ne.s32.totalorder %s322, %s338
      %p340 = scmp.eq.s32.totalorder %s31, 0
      %p341 = por %p339, %p340
      %p342 = scmp.le.s32.totalorder 1, %s25
      %p343 = scmp.lt.s32.totalorder %s25, 8
      %p344 = pnand %p342, %p343
      %p345 = pneg %p344
      // Predicated region
      $region9: #{encoder_decoder_forward.4} parent=5 // pred_check
        _
      $region10: #{encoder_decoder_forward.4} parent=5 // pred_check_branch
        %347 = sbr.rel (%p344) target = $region12
      $region11: #{encoder_decoder_forward.4} parent=5 // pred_region
        %s348 = ssub.s32 %s25, 1
        // Predicated region
        $region13: #{encoder_decoder_forward.4} parent=11 // pred_check
          %p349 = pneg %p46
        $region14: #{encoder_decoder_forward.4} parent=11 // pred_check_branch
          %351 = sbr.rel (%p349) target = $region16
        $region15: #{encoder_decoder_forward.4} parent=11 // pred_region
          _
        $region16: #{encoder_decoder_forward.4} parent=11 // pred_fallthru
          _
        // Predicated region
        $region17: #{encoder_decoder_forward.4} parent=11 // pred_check
          %p352 = pneg %p67
        $region18: #{encoder_decoder_forward.4} parent=11 // pred_check_branch
          %354 = sbr.rel (%p352) target = $region20
        $region19: #{encoder_decoder_forward.4} parent=11 // pred_region
          _
        $region20: #{encoder_decoder_forward.4} parent=11 // pred_fallthru
          _
        // Predicated region
        $region21: #{encoder_decoder_forward.4} parent=11 // pred_check
          %p355 = pneg %p114
        $region22: #{encoder_decoder_forward.4} parent=11 // pred_check_branch
          %357 = sbr.rel (%p355) target = $region24
        $region23: #{encoder_decoder_forward.4} parent=11 // pred_region
          _
        $region24: #{encoder_decoder_forward.4} parent=11 // pred_fallthru
          _
        // Predicated region
        $region25: #{encoder_decoder_forward.4} parent=11 // pred_check
          %p358 = pneg %p135
        $region26: #{encoder_decoder_forward.4} parent=11 // pred_check_branch
          %360 = sbr.rel (%p358) target = $region28
        $region27: #{encoder_decoder_forward.4} parent=11 // pred_region
          _
        $region28: #{encoder_decoder_forward.4} parent=11 // pred_fallthru
          _
        // Predicated region
        $region29: #{encoder_decoder_forward.4} parent=11 // pred_check
          %p361 = pneg %p156
        $region30: #{encoder_decoder_forward.4} parent=11 // pred_check_branch
          %363 = sbr.rel (%p361) target = $region32
        $region31: #{encoder_decoder_forward.4} parent=11 // pred_region
          _
        $region32: #{encoder_decoder_forward.4} parent=11 // pred_fallthru
          _
        // Predicated region
        $region33: #{encoder_decoder_forward.4} parent=11 // pred_check
          %p364 = pneg %p177
        $region34: #{encoder_decoder_forward.4} parent=11 // pred_check_branch
          %366 = sbr.rel (%p364) target = $region36
        $region35: #{encoder_decoder_forward.4} parent=11 // pred_region
          _
        $region36: #{encoder_decoder_forward.4} parent=11 // pred_fallthru
          _
        // Predicated region
        $region37: #{encoder_decoder_forward.4} parent=11 // pred_check
          %p367 = pneg %p198
        $region38: #{encoder_decoder_forward.4} parent=11 // pred_check_branch
          %369 = sbr.rel (%p367) target = $region40
        $region39: #{encoder_decoder_forward.4} parent=11 // pred_region
          _
        $region40: #{encoder_decoder_forward.4} parent=11 // pred_fallthru
          _
        // Predicated region
        $region41: #{encoder_decoder_forward.4} parent=11 // pred_check
          %p370 = pneg %p219
        $region42: #{encoder_decoder_forward.4} parent=11 // pred_check_branch
          %372 = sbr.rel (%p370) target = $region44
        $region43: #{encoder_decoder_forward.4} parent=11 // pred_region
          _
        $region44: #{encoder_decoder_forward.4} parent=11 // pred_fallthru
          _
        // Predicated region
        $region45: #{encoder_decoder_forward.4} parent=11 // pred_check
          %p373 = pneg %p240
        $region46: #{encoder_decoder_forward.4} parent=11 // pred_check_branch
          %375 = sbr.rel (%p373) target = $region48
        $region47: #{encoder_decoder_forward.4} parent=11 // pred_region
          _
        $region48: #{encoder_decoder_forward.4} parent=11 // pred_fallthru
          _
        // Predicated region
        $region49: #{encoder_decoder_forward.4} parent=11 // pred_check
          %p376 = pneg %p261
        $region50: #{encoder_decoder_forward.4} parent=11 // pred_check_branch
          %378 = sbr.rel (%p376) target = $region52
        $region51: #{encoder_decoder_forward.4} parent=11 // pred_region
          _
        $region52: #{encoder_decoder_forward.4} parent=11 // pred_fallthru
          _
        // Predicated region
        $region53: #{encoder_decoder_forward.4} parent=11 // pred_check
          %p379 = pneg %p282
        $region54: #{encoder_decoder_forward.4} parent=11 // pred_check_branch
          %381 = sbr.rel (%p379) target = $region56
        $region55: #{encoder_decoder_forward.4} parent=11 // pred_region
          _
        $region56: #{encoder_decoder_forward.4} parent=11 // pred_fallthru
          _
      $region12: #{encoder_decoder_forward.4} parent=5 // pred_fallthru
        _
      %p382 = scmp.lt.s32.totalorder %s25, 7
      // Predicated region
      $region57: #{encoder_decoder_forward.4} parent=5 // pred_check
        %p383 = pneg %p382
      $region58: #{encoder_decoder_forward.4} parent=5 // pred_check_branch
        %385 = sbr.rel (%p383) target = $region60
      $region59: #{encoder_decoder_forward.4} parent=5 // pred_region
        // Predicated region
        $region61: #{encoder_decoder_forward.4} parent=59 // pred_check
          %p386 = pneg %p87
        $region62: #{encoder_decoder_forward.4} parent=59 // pred_check_branch
          %388 = sbr.rel (%p386) target = $region64
        $region63: #{encoder_decoder_forward.4} parent=59 // pred_region
          %p389 = scmp.lt.s32.totalorder %s25, 6
          %s390 = scalar_select %p389, %s25, 6
          %s391 = smul.addr %s390, 2
          %s392 = scalar_lea.vmem %s2, %s391
        $region64: #{encoder_decoder_forward.4} parent=59 // pred_fallthru
          _
      $region60: #{encoder_decoder_forward.4} parent=5 // pred_fallthru
        _
      %p393 = scmp.le.s32.totalorder 1, %s25
      %p394 = scmp.lt.s32.totalorder %s25, 8
      %p395 = pnand %p393, %p394
      %p396 = pneg %p395
      // Predicated region
      $region65: #{encoder_decoder_forward.4} parent=5 // pred_check
        _
      $region66: #{encoder_decoder_forward.4} parent=5 // pred_check_branch
        %398 = sbr.rel (%p395) target = $region68
      $region67: #{encoder_decoder_forward.4} parent=5 // pred_region
        %s399 = ssub.s32 %s25, 1
        %p400 = pneg %p46
        %p401 = pneg %p43
        %p402 = pneg %p67
        %p403 = pneg %p64
        %p404 = scmp.lt.s32.totalorder %s30, 6
        %s405 = scalar_select %p404, %s30, 6
        %s406 = smul.addr %s405, 2
        %s407 = scalar_lea.vmem %s2, %s406
        %p408 = pneg %p93
        %p409 = pneg %p90
        %p410 = pneg %p114
        %p411 = pneg %p111
        %p412 = pneg %p135
        %p413 = pneg %p132
        %p414 = pneg %p156
        %p415 = pneg %p153
        %p416 = pneg %p177
        %p417 = pneg %p174
        %p418 = pneg %p198
        %p419 = pneg %p195
        %p420 = pneg %p219
        %p421 = pneg %p216
        %p422 = pneg %p240
        %p423 = pneg %p237
        %p424 = pneg %p261
        %p425 = pneg %p258
        %p426 = pneg %p282
        %p427 = pneg %p279
        %p428 = pneg %p308
        %p429 = pneg %p305
        %p430 = scmp.lt.s32.totalorder %s30, 6
        %s431 = scalar_select %p430, %s30, 6
        %s432 = smul.addr %s431, 2
        %s433 = scalar_lea.vmem %s12, %s432
        %p434 = pneg %p334
        %p435 = pneg %p331
        %s436 = sand.u32 %s321, 1
        %s437 = scalar_lea.sflag [#allocation6], %s436
        %s438 = sand.u32 %s321, 1
        %s439 = smul.addr %s438, 2
        %s440 = scalar_lea.vmem [#allocation5], %s439
        %p441 = scmp.lt.s32.totalorder %s30, 6
        %s442 = scalar_select %p441, %s30, 6
        %s443 = smul.addr %s442, 2
        %s444 = scalar_lea.vmem %s2, %s443
        %p445 = scmp.lt.s32.totalorder %s30, 6
        %s446 = scalar_select %p445, %s30, 6
        %s447 = smul.addr %s446, 2
        %s448 = scalar_lea.vmem %s12, %s447
        %p450 = scmp.eq.s32.totalorder %s30, 0
        // Predicated region
        $region69: #{encoder_decoder_forward.4} parent=67 // pred_check
          %p451 = pneg %p450
        $region70: #{encoder_decoder_forward.4} parent=67 // pred_check_branch
          %453 = sbr.rel (%p451) target = $region72
        $region71: #{encoder_decoder_forward.4} parent=67 // pred_region
          %v454 = vld [vmem:[%s7] sm:$0x3]
          %vm455 = vcmask 254976
          %456 = vst.msk [vmem:[#allocation2] sm:$0x3] %vm455, %v454
          %v457 = vld [vmem:[%s7] sm:$0x3]
          %459 = vrot.lane.b32.xlu0 %v457, 96
          %v460 = vpop.permute.xlu0 %459
          %462 = vst.msk [vmem:[#allocation3] sm:$0x3] %vm455, %v460
        $region72: #{encoder_decoder_forward.4} parent=67 // pred_fallthru
          _
        %v463 = vld [vmem:[%s0] sm:$0xf]
        %v464 = vld [vmem:[%s0 + $0x4] sm:$0xf]
        %v465 = vld [vmem:[%s0 + $0x8] sm:$0xf]
        %v466 = vld [vmem:[%s0 + $0xc] sm:$0xf]
        %v467 = vld [vmem:[#allocation2] sm:$0x3]
        %v468 = vld [vmem:[#allocation3] sm:$0x3]
        %v469 = vld [vmem:[%s3] sm:$0xff]
        %v470 = vld [vmem:[%s3 + $0x8] sm:$0xff]
        %v471 = vld [vmem:[%s3 + $0x10] sm:$0xff]
        %v472 = vld [vmem:[%s3 + $0x18] sm:$0xff]
        %v473 = vld [vmem:[%s4] sm:$0x1]
        %v475 = vperm.slane %v473, 0
        %vm477 = vcmask 261120
        %v479 = vsel %vm477, %v467, 0
        %481 = vmatpush.msra.mxu0 0.0
        %482 = vmatpush.msra.mxu0 0.0
        %483 = vmatpush.msra.mxu0 0.0
        %484 = vmatpush.msra.mxu0 0.0
        %485 = vmatpush.msra.mxu0 0.0
        %486 = vmatpush.msra.mxu0 0.0
        %487 = vmatpush.msra.mxu0 0.0
        %488 = vmatpush.msra.mxu0 0.0
        %489 = vmatpush.msra.mxu0 0.0
        %490 = vmatpush.msra.mxu0 0.0
        %491 = vmatpush.msra.mxu0 0.0
        %492 = vmatpush.msra.mxu0 0.0
        %493 = vmatpush.msra.mxu0 %v472
        %494 = vmatpush.msra.mxu0 %v471
        %495 = vmatpush.msra.mxu0 %v470
        %496 = vmatpush.msra.mxu0 %v469
        %497 = vmatmul.f32.gmra.mxu0 %v479
        %v498 = vpop.f32.mrf.mxu0
        %v499 = vadd.f32 %v475, %v498
        %500 = vdwg.mxu0
        %v501 = vld [vmem:[%s1] sm:$0xff]
        %v502 = vld [vmem:[%s1 + $0x8] sm:$0xff]
        %v503 = vld [vmem:[%s1 + $0x10] sm:$0xff]
        %v504 = vld [vmem:[%s1 + $0x18] sm:$0xff]
        %v506 = vrot.slane %v499, 1
        %v507 = vperm.slane %v499, 0
        %v508 = vperm.slane %v506, 0
        %v511 = vadd.f32 %v501, %v507
        %v512 = vadd.f32 %v502, %v507
        %v513 = vadd.f32 %v503, %v508
        %v514 = vadd.f32 %v504, %v508
        %v515 = vtanh.pop %v511
        %v516 = vtanh.pop %v512
        %v517 = vtanh.pop %v513
        %v518 = vtanh.pop %v514
        %v519 = vld [vmem:[%s5] sm:$0x1]
        %v521 = vperm.slane %v519, 0
        %v523 = vmul.f32 %v515, %v521
        %v524 = vmul.f32 %v516, %v521
        %v525 = vmul.f32 %v517, %v521
        %v526 = vmul.f32 %v518, %v521
        %v527 = vsel %vm477, %v523, 0.0
        %528 = vadd.xlane.f32.xlu0 %v527
        %v529 = vpop.xlane.xlu0 %528
        %v530 = vsel %vm477, %v524, 0.0
        %531 = vadd.xlane.f32.xlu0 %v530
        %v532 = vpop.xlane.xlu0 %531
        %v533 = vsel %vm477, %v525, 0.0
        %534 = vadd.xlane.f32.xlu0 %v533
        %v535 = vpop.xlane.xlu0 %534
        %v536 = vsel %vm477, %v526, 0.0
        %537 = vadd.xlane.f32.xlu0 %v536
        %v538 = vpop.xlane.xlu0 %537
        %v539 = vld [vmem:[#allocation4] sm:$0x1]
        %v541 = vperm.slane %v539, 0
        %542 = vset.pattern.permute.xlu0 0
        %543 = vperm.xlu0 %542, %v541
        %v544 = vpop.permute.xlu0 %543
        %v546 = vadd.f32 %v529, %v544
        %v547 = vadd.f32 %v532, %v544
        %v548 = vadd.f32 %v535, %v544
        %v549 = vadd.f32 %v538, %v544
        %v554 = vlaneseq
        %v555 = vand.u32 %v554, 127
        %v556 = vperm.slane %v546, %v555
        %v557 = vadd.s32 %v555, 4294967288
        %v558 = vperm.slane %v547, %v557
        %vm559 = vcmask 130112
        %v560 = vsel %vm559, %v558, %v556
        %v561 = vperm.slane %v548, %v555
        %v562 = vperm.slane %v549, %v557
        %v563 = vsel %vm559, %v562, %v561
        %vm564 = vcmask 1041409
        %v565 = vsel %vm564, %v563, %v560
        %vm567 = vcmask 123904
        %v568 = vsel %vm567, %v565, -inf
        %569 = vmax.xlane.f32.xlu0 %v568
        %v570 = vpop.xlane.xlu0 %569
        %v572 = vperm.slane %v570, 0
        %v573 = vperm.slane %v570, 1
        %v576 = vsub.f32 %v546, %v572
        %v577 = vsub.f32 %v547, %v572
        %v578 = vsub.f32 %v548, %v573
        %v579 = vsub.f32 %v549, %v573
        %v580 = vmul.f32 %v576, 1.442695
        %v581 = vpow.pop %v580
        %v582 = vmul.f32 %v577, 1.442695
        %v583 = vpow.pop %v582
        %v584 = vmul.f32 %v578, 1.442695
        %v585 = vpow.pop %v584
        %v586 = vmul.f32 %v579, 1.442695
        %v587 = vpow.pop %v586
        %592 = vset.pattern.permute.xlu0 0
        %593 = vperm.xlu0 %592, %v581
        %v594 = vpop.permute.xlu0 %593
        %595 = vset.pattern.permute.xlu0 0
        %596 = vperm.xlu0 %595, %v583
        %v597 = vpop.permute.xlu0 %596
        %598 = vset.pattern.permute.xlu0 0
        %599 = vperm.xlu0 %598, %v585
        %v600 = vpop.permute.xlu0 %599
        %601 = vset.pattern.permute.xlu0 0
        %602 = vperm.xlu0 %601, %v587
        %v603 = vpop.permute.xlu0 %602
        %v604 = vperm.slane %v594, %v555
        %v605 = vperm.slane %v597, %v557
        %v606 = vsel %vm559, %v605, %v604
        %v607 = vperm.slane %v600, %v555
        %v608 = vperm.slane %v603, %v557
        %v609 = vsel %vm559, %v608, %v607
        %v610 = vsel %vm564, %v609, %v606
        %v612 = vsel %vm567, %v610, 0.0
        %613 = vadd.xlane.f32.xlu0 %v612
        %v614 = vpop.xlane.xlu0 %613
        %v616 = vperm.slane %v614, 0
        %v617 = vperm.slane %v614, 1
        %v620 = vrcp.pop %v616
        %v621 = vmul.f32 %v616, %v620
        %v622 = vsub.f32 1.0, %v621
        %v623 = vmul.f32 %v620, %v622
        %v624 = vadd.f32 %v620, %v623
        %vm625 = vweird.f32 %v616
        %vm626 = vweird.f32 %v620
        %vm627 = vmor %vm625, %vm626
        %v628 = vsel %vm627, %v620, %v624
        %v629 = vand.u32 2147483647, %v616
        %vm630 = vcmp.eq.f32.partialorder %v629, 8.507059e+37
        %v631 = vand.u32 %v616, 2147483648
        %v632 = vor.u32 1.1754944e-38, %v631
        %v633 = vsel %vm630, %v632, %v628
        %v634 = vmul.f32 %v581, %v633
        %v635 = vmul.f32 %v583, %v633
        %v636 = vrcp.pop %v617
        %v637 = vmul.f32 %v617, %v636
        %v638 = vsub.f32 1.0, %v637
        %v639 = vmul.f32 %v636, %v638
        %v640 = vadd.f32 %v636, %v639
        %vm641 = vweird.f32 %v617
        %vm642 = vweird.f32 %v636
        %vm643 = vmor %vm641, %vm642
        %v644 = vsel %vm643, %v636, %v640
        %v645 = vand.u32 2147483647, %v617
        %vm646 = vcmp.eq.f32.partialorder %v645, 8.507059e+37
        %v647 = vand.u32 %v617, 2147483648
        %v648 = vor.u32 1.1754944e-38, %v647
        %v649 = vsel %vm646, %v648, %v644
        %v650 = vmul.f32 %v585, %v649
        %v651 = vmul.f32 %v587, %v649
        %v652 = vunpack.c.l.bf16 %v463
        %v653 = vunpack.c.l.bf16 %v464
        %v654 = vunpack.c.l.bf16 %v465
        %v655 = vunpack.c.l.bf16 %v466
        %657 = vset.pattern.permute.xlu0 0
        %658 = vperm.xlu0 %657, %v634
        %v659 = vpop.permute.xlu0 %658
        %662 = vset.pattern.permute.xlu0 0
        %663 = vperm.xlu0 %662, %v635
        %v664 = vpop.permute.xlu0 %663
        %667 = vset.pattern.permute.xlu0 0
        %668 = vperm.xlu0 %667, %v650
        %v669 = vpop.permute.xlu0 %668
        %672 = vset.pattern.permute.xlu0 0
        %673 = vperm.xlu0 %672, %v651
        %v674 = vpop.permute.xlu0 %673
        %v676 = vmul.f32 %v652, %v659
        %v677 = vmul.f32 %v653, %v664
        %v678 = vmul.f32 %v654, %v669
        %v679 = vmul.f32 %v655, %v674
        %v680 = vsel %vm477, %v676, 0.0
        %v681 = vsel %vm477, %v677, 0.0
        %v682 = vadd.f32 %v680, %v681
        %v683 = vrot.slane %v682, 4
        %v684 = vadd.f32 %v682, %v683
        %v685 = vrot.slane %v684, 2
        %v686 = vadd.f32 %v684, %v685
        %v687 = vrot.slane %v686, 1
        %v688 = vadd.f32 %v686, %v687
        %v689 = vsel %vm477, %v678, 0.0
        %v690 = vsel %vm477, %v679, 0.0
        %v691 = vadd.f32 %v689, %v690
        %v692 = vrot.slane %v691, 4
        %v693 = vadd.f32 %v691, %v692
        %v694 = vrot.slane %v693, 2
        %v695 = vadd.f32 %v693, %v694
        %v696 = vrot.slane %v695, 1
        %v697 = vadd.f32 %v695, %v696
        %v698 = vld [vmem:[%s444] sm:$0x3]
        %v699 = vpack.c.bf16 %v698, %v698
        %v700 = vld [vmem:[%s8] sm:$0xf]
        %v701 = vld [vmem:[%s8 + $0x4] sm:$0xf]
        %v702 = vld [vmem:[%s8 + $0x8] sm:$0xf]
        %v703 = vld [vmem:[%s8 + $0xc] sm:$0xf]
        %v704 = vpack.c.bf16 %v688, %v688
        %v705 = vpack.c.bf16 %v697, %v697
        %v706 = vld [vmem:[%s9] sm:$0xf]
        %v707 = vld [vmem:[%s9 + $0x4] sm:$0xf]
        %v708 = vld [vmem:[%s9 + $0x8] sm:$0xf]
        %v709 = vld [vmem:[%s9 + $0xc] sm:$0xf]
        %v712 = vunpack.c.l.b16 %v704
        %v713 = vunpack.c.l.b16 %v705
        %v714 = vsel %vm564, %v713, %v712
        %v715 = vpack.c.b16 %v714, %v714
        %v720 = vunpack.c.l.b16 %v706
        %v721 = vunpack.c.l.b16 %v707
        %v722 = vunpack.c.l.b16 %v708
        %v723 = vunpack.c.l.b16 %v709
        %v724 = vpack.c.b16 %v721, %v720
        %v725 = vpack.c.b16 %v723, %v722
        %v729 = vsel %vm477, %v715, 0
        %731 = vmatpush.bf16.msra.mxu0 0
        %732 = vmatpush.bf16.msra.mxu0 0
        %733 = vmatpush.bf16.msra.mxu0 0
        %734 = vmatpush.bf16.msra.mxu0 0
        %735 = vmatpush.bf16.msra.mxu0 0
        %736 = vmatpush.bf16.msra.mxu0 0
        %737 = vmatpush.bf16.msra.mxu0 %v725
        %738 = vmatpush.bf16.msra.mxu0 %v724
        %739 = vmatmul.bf16.gmra.mxu0 %v729
        %v740 = vpop.f32.mrf.mxu0
        %v741 = vadd.f32 0.0, %v740
        %v742 = vpop.f32.mrf.mxu0
        %743 = vdwg.mxu0
        %v748 = vunpack.c.l.b16 %v700
        %v749 = vunpack.c.l.b16 %v701
        %v750 = vunpack.c.l.b16 %v702
        %v751 = vunpack.c.l.b16 %v703
        %v752 = vpack.c.b16 %v749, %v748
        %v753 = vpack.c.b16 %v751, %v750
        %v757 = vsel %vm477, %v699, 0
        %759 = vmatpush.bf16.msra.mxu0 0
        %760 = vmatpush.bf16.msra.mxu0 0
        %761 = vmatpush.bf16.msra.mxu0 0
        %762 = vmatpush.bf16.msra.mxu0 0
        %763 = vmatpush.bf16.msra.mxu0 0
        %764 = vmatpush.bf16.msra.mxu0 0
        %765 = vmatpush.bf16.msra.mxu0 %v753
        %766 = vmatpush.bf16.msra.mxu0 %v752
        %767 = vmatmul.bf16.gmra.mxu0 %v757
        %v768 = vpop.f32.mrf.mxu0
        %v769 = vadd.f32 %v741, %v768
        %v770 = vpop.f32.mrf.mxu0
        %771 = vdwg.mxu0
        %v772 = vld [vmem:[%s10] sm:$0xff]
        %v773 = vld [vmem:[%s10 + $0x8] sm:$0xff]
        %v774 = vld [vmem:[%s10 + $0x10] sm:$0xff]
        %v775 = vld [vmem:[%s10 + $0x18] sm:$0xff]
        %776 = vmatpush.msra.mxu0 0.0
        %777 = vmatpush.msra.mxu0 0.0
        %778 = vmatpush.msra.mxu0 0.0
        %779 = vmatpush.msra.mxu0 0.0
        %780 = vmatpush.msra.mxu0 0.0
        %781 = vmatpush.msra.mxu0 0.0
        %782 = vmatpush.msra.mxu0 0.0
        %783 = vmatpush.msra.mxu0 0.0
        %784 = vmatpush.msra.mxu0 0.0
        %785 = vmatpush.msra.mxu0 0.0
        %786 = vmatpush.msra.mxu0 0.0
        %787 = vmatpush.msra.mxu0 0.0
        %788 = vmatpush.msra.mxu0 %v775
        %789 = vmatpush.msra.mxu0 %v774
        %790 = vmatpush.msra.mxu0 %v773
        %791 = vmatpush.msra.mxu0 %v772
        %792 = vmatmul.f32.gmra.mxu0 %v479
        %v793 = vpop.f32.mrf.mxu0
        %v794 = vadd.f32 0.0, %v793
        %795 = vdwg.mxu0
        %v796 = vadd.f32 %v769, %v794
        %v797 = vld [vmem:[%s11] sm:$0x1]
        %v799 = vperm.slane %v797, 0
        %v801 = vadd.f32 %v796, %v799
        %v802 = vxor.u32 %v801, 2147483648
        %v803 = vmul.f32 %v802, 1.442695
        %v804 = vpow.pop %v803
        %v805 = vadd.f32 %v804, 1.0
        %v806 = vrcp.pop %v805
        %v807 = vmul.f32 %v805, %v806
        %v808 = vsub.f32 1.0, %v807
        %v809 = vmul.f32 %v806, %v808
        %v810 = vadd.f32 %v806, %v809
        %vm811 = vweird.f32 %v805
        %vm812 = vweird.f32 %v806
        %vm813 = vmor %vm811, %vm812
        %v814 = vsel %vm813, %v806, %v810
        %v815 = vand.u32 2147483647, %v805
        %vm816 = vcmp.eq.f32.partialorder %v815, 8.507059e+37
        %v817 = vand.u32 %v805, 2147483648
        %v818 = vor.u32 1.1754944e-38, %v817
        %v819 = vsel %vm816, %v818, %v814
        %v820 = vmul.f32 1.0, %v819
        %v821 = vtanh.pop %v801
        %823 = vrot.lane.b32.xlu0 %v468, 32
        %v824 = vpop.permute.xlu0 %823
        %v826 = vmul.f32 %v820, %v824
        %828 = vrot.lane.b32.xlu0 %v821, 64
        %v829 = vpop.permute.xlu0 %828
        %v831 = vmul.f32 %v820, %v829
        %833 = vrot.lane.b32.xlu0 %v831, 32
        %v834 = vpop.permute.xlu0 %833
        %v836 = vadd.f32 %v826, %v834
        %v837 = vtanh.pop %v836
        %839 = vrot.lane.b32.xlu0 %v837, 64
        %v840 = vpop.permute.xlu0 %839
        %v842 = vmul.f32 %v820, %v840
        %844 = vrot.lane.b32.xlu0 %v842, 32
        %v845 = vpop.permute.xlu0 %844
        %vm847 = vcmask 254976
        %848 = vst.msk [vmem:[#allocation2] sm:$0x3] %vm847, %v845
        %850 = vrot.lane.b32.xlu0 %v836, 96
        %v851 = vpop.permute.xlu0 %850
        %853 = vst.msk [vmem:[#allocation3] sm:$0x3] %vm847, %v851
        %854 = vst.msk [vmem:[%s448] sm:$0x3] %vm847, %v845
        %v855 = vperm.slane %v659, %v555
        %v856 = vperm.slane %v664, %v557
        %v857 = vsel %vm559, %v856, %v855
        %v858 = vperm.slane %v669, %v555
        %v859 = vperm.slane %v674, %v557
        %v860 = vsel %vm559, %v859, %v858
        %v861 = vsel %vm564, %v860, %v857
        %863 = vst.msk [vmem:[%s440] sm:$0x3] %vm567, %v861
        %p864 = scmp.lt.s32.totalorder %s30, 6
        %s865 = scalar_select %p864, %s30, 6
        %s866 = smul.addr %s865, 2
        %s867 = scalar_lea.vmem %s12, %s866
        %s868 = sand.u32 %s321, 1
        %s869 = scalar_lea.sflag [#allocation6], %s868
        %s870 = sand.u32 %s321, 1
        %s871 = smul.addr %s870, 2
        %s872 = scalar_lea.vmem [#allocation5], %s871
        // Predicated region
        $region73: #{encoder_decoder_forward.4} parent=67 // pred_check
          %p873 = pneg %p305
        $region74: #{encoder_decoder_forward.4} parent=67 // pred_check_branch
          %875 = sbr.rel (%p873) target = $region76
        $region75: #{encoder_decoder_forward.4} parent=67 // pred_region
          _
        $region76: #{encoder_decoder_forward.4} parent=67 // pred_fallthru
          _
        // Predicated region
        $region77: #{encoder_decoder_forward.4} parent=67 // pred_check
          %p876 = pneg %p331
        $region78: #{encoder_decoder_forward.4} parent=67 // pred_check_branch
          %878 = sbr.rel (%p876) target = $region80
        $region79: #{encoder_decoder_forward.4} parent=67 // pred_region
          %880 = vsyncadd %s869, 0
          %s881 = smul.addr %s30, 2
          %s882 = scalar_lea.hbm %s13, %s881
          %s884 = sshll.u32 %s872, 4
          %s885 = int_to_ptr.vmem [resolvable:$true] %s884
          %s886 = sshll.u32 %s882, 4
          %s887 = int_to_ptr.hbm [resolvable:$true] %s886
          %889 = dma.vmem_to_hbm [thread:$0]  %s885, 32, %s887, %s869
        $region80: #{encoder_decoder_forward.4} parent=67 // pred_fallthru
          _
      $region68: #{encoder_decoder_forward.4} parent=5 // pred_fallthru
        _
      %p890 = scmp.le.s32.totalorder 2, %s25
      // Predicated region
      $region81: #{encoder_decoder_forward.4} parent=5 // pred_check
        %p891 = pneg %p890
      $region82: #{encoder_decoder_forward.4} parent=5 // pred_check_branch
        %893 = sbr.rel (%p891) target = $region84
      $region83: #{encoder_decoder_forward.4} parent=5 // pred_region
        %s894 = ssub.s32 %s25, 2
        // Predicated region
        $region85: #{encoder_decoder_forward.4} parent=83 // pred_check
          %p895 = pneg %p311
        $region86: #{encoder_decoder_forward.4} parent=83 // pred_check_branch
          %897 = sbr.rel (%p895) target = $region88
        $region87: #{encoder_decoder_forward.4} parent=83 // pred_region
          %p898 = scmp.lt.s32.totalorder %s31, 6
          %s899 = scalar_select %p898, %s31, 6
          %s900 = smul.addr %s899, 2
          %s901 = scalar_lea.vmem %s12, %s900
        $region88: #{encoder_decoder_forward.4} parent=83 // pred_fallthru
          _
        // Predicated region
        $region89: #{encoder_decoder_forward.4} parent=83 // pred_check
          %p902 = pneg %p337
        $region90: #{encoder_decoder_forward.4} parent=83 // pred_check_branch
          %904 = sbr.rel (%p902) target = $region92
        $region91: #{encoder_decoder_forward.4} parent=83 // pred_region
          %s905 = sand.u32 %s322, 1
          %s906 = scalar_lea.sflag [#allocation6], %s905
          %s907 = sand.u32 %s322, 1
          %s908 = smul.addr %s907, 2
          %s909 = scalar_lea.vmem [#allocation5], %s908
          %911 = dma.done %s906, 32
        $region92: #{encoder_decoder_forward.4} parent=83 // pred_fallthru
          _
      $region84: #{encoder_decoder_forward.4} parent=5 // pred_fallthru
        _
    $region6: #{encoder_decoder_forward.4} parent=1 // loop_footer
      %s29 = sadd.s32 1, %s25
    $region7: #{encoder_decoder_forward.4} parent=1 // loop_footer_branch
      %24 = sbr.rel target = $region3
    $region8: #{encoder_decoder_forward.4} parent=1 // loop_exit
      _
    %912 = vsyncpa [#allocation6], 1
    %s913 = scalar_lea.sflag [#allocation6], 1
    %914 = vsyncpa %s913, 1

</llo_original>
